<compile_context>
chip_gen: v7x
topology: tpu7x:2x2x1
jax: 0.10.0
libtpu: 0.0.40
codegen_flags: <defaults>
</compile_context>

<pallas_src>
import functools

import jax
import jax.numpy as jnp
import numpy as np
from jax.experimental import pallas as pl
from jax.experimental.pallas import tpu as pltpu

# ----------------------------- configuration --------------------------------
DIM_IN = 32          # dim_in
DIM = 64             # dim (multiple of DIM_HEADS)
DIM_OUT = 32         # dim_out
DIM_OUT_PAD = 128    # lane-dense padded output width (sliced back to DIM_OUT)
DEPTH = 2            # depth
DIM_HEADS = 64       # dim_heads
NUM_HEADS = DIM // DIM_HEADS
FF_MULT = 4
FF = DIM * FF_MULT                       # GLU inner dim
ROT = max(DIM_HEADS // 2, 32)            # RotaryEmbedding(max(dim_heads//2, 32))
assert ROT <= DIM_HEADS and ROT % 2 == 0
CAUSAL = False
LN_EPS = 1e-5
NEG_MASK = -1e30     # finite mask value (avoids NaN on fully-masked rows)


# --------------------------- shared small helpers ----------------------------
def _layernorm(v, gamma):
    mu = jnp.mean(v, axis=-1, keepdims=True)
    var = jnp.mean(jnp.square(v - mu), axis=-1, keepdims=True)
    return (v - mu) * jax.lax.rsqrt(var + LN_EPS) * gamma


def rotary_cos_sin(seq_len):
    # RotaryEmbedding(dim=ROT).forward_from_seq_len(seq_len): base=10000, interp=1.
    inv_freq = 1.0 / (10000.0 ** (jnp.arange(0, ROT, 2, dtype=jnp.float32) / ROT))
    t = jnp.arange(seq_len, dtype=jnp.float32)
    freqs = jnp.outer(t, inv_freq)                       # (S, ROT//2)
    freqs = jnp.concatenate([freqs, freqs], axis=-1)     # (S, ROT)
    return jnp.cos(freqs), jnp.sin(freqs)


def _full_width_rope_tables(seq_len):
    """Full-width (S, DIM) cos/sin tables: identity (cos=1, sin=0) on non-rotary
    lanes, replicated across heads, so partial RoPE becomes two element-wise FMAs."""
    cos, sin = rotary_cos_sin(seq_len)                   # (S, ROT)
    pad = DIM_HEADS - ROT
    cos_h = jnp.concatenate([cos, jnp.ones((seq_len, pad), jnp.float32)], axis=-1)
    sin_h = jnp.concatenate([sin, jnp.zeros((seq_len, pad), jnp.float32)], axis=-1)
    return jnp.tile(cos_h, (1, NUM_HEADS)), jnp.tile(sin_h, (1, NUM_HEADS))


def _rope_rotate_matrix():
    """Signed permutation P with rotate_half(t) == t @ P on the rotary lanes
    (block-diagonal per head, zero on the pass-through lanes whose sin is 0)."""
    P = np.zeros((DIM, DIM), np.float32)
    half = ROT // 2
    for h in range(NUM_HEADS):
        o = h * DIM_HEADS
        for j in range(half):
            P[o + j + half, o + j] = -1.0          # rotated[j]        = -t[j + half]
            P[o + j, o + j + half] = 1.0           # rotated[j + half] =  t[j]
    return jnp.asarray(P)


# ------------------------------ fused Pallas kernel ---------------------------
def _fused_forward_kernel(*refs, depth, num_heads, causal, has_ctrl):
    if has_ctrl:
        (x_ref, cos_ref, sin_ref, ctrl_ref,
         w_in_ref, w_out_ref, gam_ref, wqkv_ref, wo_ref,
         wglu_ref, bglu_ref, wff2_ref, bff2_ref, o_ref) = refs
    else:
        (x_ref, cos_ref, sin_ref,
         w_in_ref, w_out_ref, gam_ref, wqkv_ref, wo_ref,
         wglu_ref, bglu_ref, wff2_ref, bff2_ref, o_ref) = refs
        ctrl_ref = None

    f32, bf16 = jnp.float32, jnp.bfloat16

    cos_t = cos_ref[...]                                   # (S, D) f32, position-only
    sin_t = sin_ref[...]

    # project_in (bias-free) on this batch element's (S, DIM_IN) slab
    x = jnp.dot(x_ref[0].astype(bf16), w_in_ref[...], preferred_element_type=f32)  # (S, D)
    seq, dim = x.shape
    dh = dim // num_heads

    for d in range(depth):                                 # static unroll over depth
        if ctrl_ref is not None:
            x = x + ctrl_ref[d, 0]                         # controlnet embed for layer d

        # ----- self-attention branch -----
        h = _layernorm(x, gam_ref[2 * d]).astype(bf16)
        # fused [scale*Wq | scale*Wq@P | Wk | Wk@P | Wv] projection: one N=5*D matmul
        qkv = jnp.dot(h, wqkv_ref[d], preferred_element_type=f32)        # (S, 5*D)
        # partial RoPE: pure element-wise (rotate_half folded into the @P weights)
        q = qkv[:, 0 * dim:1 * dim] * cos_t + qkv[:, 1 * dim:2 * dim] * sin_t
        k = qkv[:, 2 * dim:3 * dim] * cos_t + qkv[:, 3 * dim:4 * dim] * sin_t
        v = qkv[:, 4 * dim:5 * dim]

        head_outs = []
        for hh in range(num_heads):     # num_heads == 1 here -> slices are no-ops
            sl = slice(hh * dh, (hh + 1) * dh)
            qh = q[:, sl].astype(bf16)
            kh = k[:, sl].astype(bf16)
            vh = v[:, sl].astype(bf16)
            s = jnp.einsum("qd,kd->qk", qh, kh, preferred_element_type=f32)  # (S, S)
            if causal:
                ri = jax.lax.broadcasted_iota(jnp.int32, s.shape, 0)
                ci = jax.lax.broadcasted_iota(jnp.int32, s.shape, 1)
                s = jnp.where(ci <= ri, s, NEG_MASK)
            m = jnp.max(s, axis=-1, keepdims=True)
            p = jnp.exp(s - m)
            inv = pl.reciprocal(jnp.sum(p, axis=-1, keepdims=True), approx=True)
            oh = jnp.einsum("qk,kd->qd", (p * inv).astype(bf16), vh,
                            preferred_element_type=f32)
            head_outs.append(oh)
        attn = head_outs[0] if num_heads == 1 else jnp.concatenate(head_outs, axis=-1)
        x = x + jnp.dot(attn.astype(bf16), wo_ref[d], preferred_element_type=f32)

        # ----- GLU (SiLU-gated) feed-forward branch -----
        h2 = _layernorm(x, gam_ref[2 * d + 1]).astype(bf16)
        # fused [W_val | W_gate] projection: one N=2*FF matmul
        vg = jnp.dot(h2, wglu_ref[d], preferred_element_type=f32) + bglu_ref[d]
        val, gate = vg[:, :FF], vg[:, FF:]
        hidden = (val * (gate * jax.nn.sigmoid(gate))).astype(bf16)       # SiLU gate
        x = x + jnp.dot(hidden, wff2_ref[d], preferred_element_type=f32) + bff2_ref[d]

    # project_out (bias-free, zero-padded to 128 lanes): lane-dense store
    o_ref[0] = jnp.dot(x.astype(bf16), w_out_ref[...],
                       preferred_element_type=f32).astype(o_ref.dtype)


def fused_forward(x, cos_t, sin_t, kp, ctrl=None, *, causal):
    B, S, _ = x.shape

    in_specs = [
        pl.BlockSpec((1, S, DIM_IN), lambda b: (b, 0, 0)),      # x, one batch per step
        pl.BlockSpec(cos_t.shape, lambda b: (0, 0)),            # cos table (S, D)
        pl.BlockSpec(sin_t.shape, lambda b: (0, 0)),            # sin table (S, D)
    ]
    args = [x, cos_t, sin_t]
    if ctrl is not None:
        in_specs.append(pl.BlockSpec((DEPTH, 1, S, DIM), lambda b: (0, b, 0, 0)))
        args.append(ctrl)
    # weights: full arrays with constant block index -> resident across grid steps
    for name in ("w_in", "w_out", "gam", "wqkv", "wo", "wglu", "bglu", "wff2", "bff2"):
        w = kp[name]
        in_specs.append(pl.BlockSpec(w.shape, (lambda nd: (lambda b: (0,) * nd))(w.ndim)))
        args.append(w)

    out = pl.pallas_call(
        functools.partial(_fused_forward_kernel, depth=DEPTH, num_heads=NUM_HEADS,
                          causal=causal, has_ctrl=ctrl is not None),
        out_shape=jax.ShapeDtypeStruct((B, S, DIM_OUT_PAD), jnp.float32),
        grid=(B,),
        in_specs=in_specs,
        out_specs=pl.BlockSpec((1, S, DIM_OUT_PAD), lambda b: (b, 0, 0)),
        compiler_params=pltpu.CompilerParams(dimension_semantics=("parallel",)),
    )(*args)
    return out[..., :DIM_OUT]


# ------------------------- parameter preparation ------------------------------
def prepare_kernel_params(params):
    """Fold attention scale + RoPE rotate_half permutation into the Q/K weights,
    fuse the five QKV projections / GLU val+gate along the output axis, stack per-layer
    weights along a leading depth axis, cast MXU operands to bf16, pad project_out to
    128 lanes."""
    bf16 = jnp.bfloat16
    scale = DIM_HEADS ** -0.5
    P = _rope_rotate_matrix()
    L = params["layers"]

    wqkv = []
    for l in L:
        wq = l["wq"] * scale                                    # scale folded into Wq
        wqkv.append(jnp.concatenate([wq, wq @ P, l["wk"], l["wk"] @ P, l["wv"]], axis=-1))

    w_out_pad = jnp.pad(params["w_out"], ((0, 0), (0, DIM_OUT_PAD - DIM_OUT)))

    return dict(
        w_in=params["w_in"].astype(bf16),
        w_out=w_out_pad.astype(bf16),
        gam=jnp.stack([g for l in L for g in (l["g1"], l["g2"])]),           # (2*DEPTH,1,D) f32
        wqkv=jnp.stack(wqkv).astype(bf16),                                   # (DEPTH, D, 5*D)
        wo=jnp.stack([l["wo"] for l in L]).astype(bf16),                     # (DEPTH, D, D)
        wglu=jnp.stack([jnp.concatenate([l["w_val"], l["w_gate"]], axis=-1)
                        for l in L]).astype(bf16),                           # (DEPTH, D, 2*FF)
        bglu=jnp.stack([jnp.concatenate([l["b_val"], l["b_gate"]], axis=-1)
                        for l in L]),                                        # (DEPTH, 1, 2*FF) f32
        wff2=jnp.stack([l["wff2"] for l in L]).astype(bf16),                 # (DEPTH, FF, D)
        bff2=jnp.stack([l["bff2"] for l in L]),                              # (DEPTH, 1, D) f32
    )


# ------------------------------ forward wrapper -------------------------------
@functools.partial(jax.jit, static_argnames=("causal",))
def continuous_transformer_forward(x, params, controlnet_embeds=None, causal=CAUSAL):
    # TODO(synk): boolean padding mask / prepend_embeds+prepend_mask, global_cond adaLN
    # path, cross-attention and conformer modules are not implemented (module defaults).
    B, S, _ = x.shape
    kp = prepare_kernel_params(params)          # traced once under jit
    cos_t, sin_t = _full_width_rope_tables(S)   # (S, D), position-only

    ctrl = None
    if controlnet_embeds is not None:
        ctrl = jnp.zeros((DEPTH, B, S, DIM), jnp.float32)
        for i, e in enumerate(controlnet_embeds[:DEPTH]):
            ctrl = ctrl.at[i].set(e)

    out = fused_forward(x, cos_t, sin_t, kp, ctrl, causal=causal)
    return out.reshape(B, S, DIM_OUT)


# --------------------------- synthetic parameters ------------------------------
def init_params(key):
    # Deterministic synthetic parameters.  NOTE: the module's default
    # zero_init_branch_outputs=True would zero Wo / FF-out (making every branch a
    # no-op); we use small non-zero values so the kernel compute is exercised.
    def nrm(k, shape, scale=0.05):
        return scale * jax.random.normal(k, shape, dtype=jnp.float32)

    nk = 10
    keys = jax.random.split(key, 2 + DEPTH * nk)
    params = {
        "w_in": nrm(keys[0], (DIM_IN, DIM)),
        "w_out": nrm(keys[1], (DIM, DIM_OUT)),
        "layers": [],
    }
    for i in range(DEPTH):
        k = keys[2 + nk * i: 2 + nk * (i + 1)]
        params["layers"].append(dict(
            g1=jnp.ones((1, DIM), jnp.float32),
            g2=jnp.ones((1, DIM), jnp.float32),
            wq=nrm(k[0], (DIM, DIM)),
            wk=nrm(k[1], (DIM, DIM)),
            wv=nrm(k[2], (DIM, DIM)),
            wo=nrm(k[3], (DIM, DIM)),
            w_val=nrm(k[4], (DIM, FF)),
            w_gate=nrm(k[5], (DIM, FF)),
            b_val=nrm(k[6], (1, FF), scale=0.01),
            b_gate=nrm(k[7], (1, FF), scale=0.01),
            wff2=nrm(k[8], (FF, DIM)),
            bff2=nrm(k[9], (1, DIM), scale=0.01),
        ))
    return params


# ------------------- pure-JAX f32 reference (original math) --------------------
def _ref_rope(t, cos, sin):
    rot = cos.shape[-1]
    tr, tp = t[..., :rot], t[..., rot:]
    half = rot // 2
    t1, t2 = tr[..., :half], tr[..., half:]
    rotated = jnp.concatenate([-t2, t1], axis=-1)
    tr = tr * cos + rotated * sin
    return jnp.concatenate([tr, tp], axis=-1) if tp.shape[-1] else tr


def reference_forward(x, params, *, causal=CAUSAL, controlnet_embeds=None):
    x = jnp.einsum("bsi,id->bsd", x, params["w_in"])
    S = x.shape[1]
    cos, sin = rotary_cos_sin(S)
    scale = DIM_HEADS ** -0.5
    for li, layer in enumerate(params["layers"]):
        if controlnet_embeds is not None and li < len(controlnet_embeds):
            x = x + controlnet_embeds[li]
        h = _layernorm(x, layer["g1"])
        q = jnp.einsum("bsd,de->bse", h, layer["wq"])
        k = jnp.einsum("bsd,de->bse", h, layer["wk"])
        v = jnp.einsum("bsd,de->bse", h, layer["wv"])
        outs = []
        for hh in range(NUM_HEADS):
            sl = slice(hh * DIM_HEADS, (hh + 1) * DIM_HEADS)
            qh = _ref_rope(q[..., sl], cos, sin)
            kh = _ref_rope(k[..., sl], cos, sin)
            vh = v[..., sl]
            s = jnp.einsum("bqd,bkd->bqk", qh, kh) * scale
            if causal:
                ri = jax.lax.broadcasted_iota(jnp.int32, s.shape, 1)
                ci = jax.lax.broadcasted_iota(jnp.int32, s.shape, 2)
                s = jnp.where(ci <= ri, s, NEG_MASK)
            outs.append(jnp.einsum("bqk,bkd->bqd", jax.nn.softmax(s, axis=-1), vh))
        attn = outs[0] if NUM_HEADS == 1 else jnp.concatenate(outs, axis=-1)
        x = x + jnp.einsum("bsd,de->bse", attn, layer["wo"])
        h2 = _layernorm(x, layer["g2"])
        val = jnp.einsum("bsd,df->bsf", h2, layer["w_val"]) + layer["b_val"]
        gate = jnp.einsum("bsd,df->bsf", h2, layer["w_gate"]) + layer["b_gate"]
        x = x + jnp.einsum("bsf,fd->bsd", val * jax.nn.silu(gate), layer["wff2"]) + layer["bff2"]
    return jnp.einsum("bsd,do->bso", x, params["w_out"])


# ---------------------------------- main ---------------------------------------
if __name__ == "__main__":
    B, S = 2, 8
    key = jax.random.PRNGKey(0)
    kx, kparam = jax.random.split(key)
    x = jax.random.normal(kx, (B, S, DIM_IN), dtype=jnp.float32)
    params = init_params(kparam)

    out = continuous_transformer_forward(x, params)
    out = jax.block_until_ready(out)
    assert out.shape == (B, S, DIM_OUT), out.shape

    ref = jax.block_until_ready(reference_forward(x, params))
    # NOTE: bf16 MXU operands + approx reciprocal -> ~1e-2 scale deviation vs pure-f32.
    if not np.allclose(np.asarray(out), np.asarray(ref), rtol=5e-2, atol=5e-2):
        max_err = float(np.max(np.abs(np.asarray(out) - np.asarray(ref))))
        raise AssertionError(f"Pallas output does not match JAX reference (max|err|={max_err})")

    print("KERNEL_OK")
</pallas_src>

<mosaic_0001>
module attributes {stable_mosaic.version = 11 : i64} {
  func.func @_fused_forward_kernel(%arg0: i32, %arg1: memref<1x8x32xf32, #tpu.memory_space<vmem>>, %arg2: memref<8x64xf32, #tpu.memory_space<vmem>>, %arg3: memref<8x64xf32, #tpu.memory_space<vmem>>, %arg4: memref<32x64xbf16, #tpu.memory_space<vmem>>, %arg5: memref<64x128xbf16, #tpu.memory_space<vmem>>, %arg6: memref<4x1x64xf32, #tpu.memory_space<vmem>>, %arg7: memref<2x64x320xbf16, #tpu.memory_space<vmem>>, %arg8: memref<2x64x64xbf16, #tpu.memory_space<vmem>>, %arg9: memref<2x64x512xbf16, #tpu.memory_space<vmem>>, %arg10: memref<2x1x512xf32, #tpu.memory_space<vmem>>, %arg11: memref<2x256x64xbf16, #tpu.memory_space<vmem>>, %arg12: memref<2x1x64xf32, #tpu.memory_space<vmem>>, %arg13: memref<1x8x128xf32, #tpu.memory_space<vmem>>) attributes {dimension_semantics = [#tpu.dimension_semantics<parallel>], iteration_bounds = array<i64: 2>, scalar_prefetch = 0 : i64, scratch_operands = 0 : i64, tpu.core_type = #tpu.core_type<tc>, window_params = [{transform_indices = @transform_0, window_bounds = array<i64: 1, 8, 32>}, {pipeline_mode = #tpu.pipeline_mode<synchronous>, transform_indices = @transform_1, window_bounds = array<i64: 8, 64>}, {pipeline_mode = #tpu.pipeline_mode<synchronous>, transform_indices = @transform_2, window_bounds = array<i64: 8, 64>}, {pipeline_mode = #tpu.pipeline_mode<synchronous>, transform_indices = @transform_3, window_bounds = array<i64: 32, 64>}, {pipeline_mode = #tpu.pipeline_mode<synchronous>, transform_indices = @transform_4, window_bounds = array<i64: 64, 128>}, {pipeline_mode = #tpu.pipeline_mode<synchronous>, transform_indices = @transform_5, window_bounds = array<i64: 4, 1, 64>}, {pipeline_mode = #tpu.pipeline_mode<synchronous>, transform_indices = @transform_6, window_bounds = array<i64: 2, 64, 320>}, {pipeline_mode = #tpu.pipeline_mode<synchronous>, transform_indices = @transform_7, window_bounds = array<i64: 2, 64, 64>}, {pipeline_mode = #tpu.pipeline_mode<synchronous>, transform_indices = @transform_8, window_bounds = array<i64: 2, 64, 512>}, {pipeline_mode = #tpu.pipeline_mode<synchronous>, transform_indices = @transform_9, window_bounds = array<i64: 2, 1, 512>}, {pipeline_mode = #tpu.pipeline_mode<synchronous>, transform_indices = @transform_10, window_bounds = array<i64: 2, 256, 64>}, {pipeline_mode = #tpu.pipeline_mode<synchronous>, transform_indices = @transform_11, window_bounds = array<i64: 2, 1, 64>}, {transform_indices = @transform_12, window_bounds = array<i64: 1, 8, 128>}]} {
    %c0 = arith.constant 0 : index
    %c0_0 = arith.constant 0 : index
    %0 = vector.load %arg2[%c0, %c0_0] : memref<8x64xf32, #tpu.memory_space<vmem>>, vector<8x64xf32>
    %c0_1 = arith.constant 0 : index
    %c0_2 = arith.constant 0 : index
    %1 = vector.load %arg3[%c0_1, %c0_2] : memref<8x64xf32, #tpu.memory_space<vmem>>, vector<8x64xf32>
    %c0_3 = arith.constant 0 : index
    %c0_4 = arith.constant 0 : index
    %c0_5 = arith.constant 0 : index
    %2 = vector.load %arg1[%c0_3, %c0_4, %c0_5] : memref<1x8x32xf32, #tpu.memory_space<vmem>>, vector<1x8x32xf32>
    %3 = vector.shape_cast %2 : vector<1x8x32xf32> to vector<8x32xf32>
    %4 = arith.truncf %3 : vector<8x32xf32> to vector<8x32xbf16>
    %c0_6 = arith.constant 0 : index
    %c0_7 = arith.constant 0 : index
    %5 = vector.load %arg4[%c0_6, %c0_7] : memref<32x64xbf16, #tpu.memory_space<vmem>>, vector<32x64xbf16>
    %cst = arith.constant dense<0.000000e+00> : vector<8x64xf32>
    %6 = tpu.matmul %4, %5, %cst {dimension_numbers = #tpu.dot_dimension_numbers<[1], [0], [0], [1], [0, 0, 1, 1], [], []>} : vector<8x32xbf16>, vector<32x64xbf16>, vector<8x64xf32> -> vector<8x64xf32>
    %c0_8 = arith.constant 0 : index
    %c0_9 = arith.constant 0 : index
    %c0_10 = arith.constant 0 : index
    %7 = vector.load %arg6[%c0_8, %c0_9, %c0_10] : memref<4x1x64xf32, #tpu.memory_space<vmem>>, vector<1x1x64xf32>
    %8 = vector.shape_cast %7 : vector<1x1x64xf32> to vector<1x64xf32>
    %cst_11 = arith.constant dense<0.000000e+00> : vector<8xf32>
    %9 = vector.multi_reduction <add>, %6, %cst_11 [1] : vector<8x64xf32> to vector<8xf32>
    %10 = vector.shape_cast %9 : vector<8xf32> to vector<8x1xf32>
    %cst_12 = arith.constant 6.400000e+01 : f32
    %11 = vector.broadcast %cst_12 : f32 to vector<8x1xf32>
    %12 = arith.divf %10, %11 : vector<8x1xf32>
    %13 = vector.broadcast %12 : vector<8x1xf32> to vector<8x64xf32>
    %14 = arith.subf %6, %13 : vector<8x64xf32>
    %15 = arith.mulf %14, %14 : vector<8x64xf32>
    %cst_13 = arith.constant dense<0.000000e+00> : vector<8xf32>
    %16 = vector.multi_reduction <add>, %15, %cst_13 [1] : vector<8x64xf32> to vector<8xf32>
    %17 = vector.shape_cast %16 : vector<8xf32> to vector<8x1xf32>
    %cst_14 = arith.constant 6.400000e+01 : f32
    %18 = vector.broadcast %cst_14 : f32 to vector<8x1xf32>
    %19 = arith.divf %17, %18 : vector<8x1xf32>
    %20 = vector.broadcast %12 : vector<8x1xf32> to vector<8x64xf32>
    %21 = arith.subf %6, %20 : vector<8x64xf32>
    %cst_15 = arith.constant 9.99999974E-6 : f32
    %22 = vector.broadcast %cst_15 : f32 to vector<8x1xf32>
    %23 = arith.addf %19, %22 : vector<8x1xf32>
    %24 = math.rsqrt %23 : vector<8x1xf32>
    %25 = vector.broadcast %24 : vector<8x1xf32> to vector<8x64xf32>
    %26 = arith.mulf %21, %25 : vector<8x64xf32>
    %27 = vector.broadcast %8 : vector<1x64xf32> to vector<8x64xf32>
    %28 = arith.mulf %26, %27 : vector<8x64xf32>
    %29 = arith.truncf %28 : vector<8x64xf32> to vector<8x64xbf16>
    %c0_16 = arith.constant 0 : index
    %c0_17 = arith.constant 0 : index
    %c0_18 = arith.constant 0 : index
    %30 = vector.load %arg7[%c0_16, %c0_17, %c0_18] : memref<2x64x320xbf16, #tpu.memory_space<vmem>>, vector<1x64x320xbf16>
    %31 = vector.shape_cast %30 : vector<1x64x320xbf16> to vector<64x320xbf16>
    %cst_19 = arith.constant dense<0.000000e+00> : vector<8x320xf32>
    %32 = tpu.matmul %29, %31, %cst_19 {dimension_numbers = #tpu.dot_dimension_numbers<[1], [0], [0], [1], [0, 0, 1, 1], [], []>} : vector<8x64xbf16>, vector<64x320xbf16>, vector<8x320xf32> -> vector<8x320xf32>
    %33 = vector.extract_strided_slice %32 {offsets = [0, 0], sizes = [8, 64], strides = [1, 1]} : vector<8x320xf32> to vector<8x64xf32>
    %34 = arith.mulf %33, %0 : vector<8x64xf32>
    %35 = vector.extract_strided_slice %32 {offsets = [0, 64], sizes = [8, 64], strides = [1, 1]} : vector<8x320xf32> to vector<8x64xf32>
    %36 = arith.mulf %35, %1 : vector<8x64xf32>
    %37 = arith.addf %34, %36 : vector<8x64xf32>
    %38 = vector.extract_strided_slice %32 {offsets = [0, 128], sizes = [8, 64], strides = [1, 1]} : vector<8x320xf32> to vector<8x64xf32>
    %39 = arith.mulf %38, %0 : vector<8x64xf32>
    %40 = vector.extract_strided_slice %32 {offsets = [0, 192], sizes = [8, 64], strides = [1, 1]} : vector<8x320xf32> to vector<8x64xf32>
    %41 = arith.mulf %40, %1 : vector<8x64xf32>
    %42 = arith.addf %39, %41 : vector<8x64xf32>
    %43 = vector.extract_strided_slice %32 {offsets = [0, 256], sizes = [8, 64], strides = [1, 1]} : vector<8x320xf32> to vector<8x64xf32>
    %44 = arith.truncf %37 : vector<8x64xf32> to vector<8x64xbf16>
    %45 = arith.truncf %42 : vector<8x64xf32> to vector<8x64xbf16>
    %46 = arith.truncf %43 : vector<8x64xf32> to vector<8x64xbf16>
    "tpu.trace_start"() <{level = 10 : i32, message = "qd,kd->qk"}> : () -> ()
    %cst_20 = arith.constant dense<0.000000e+00> : vector<8x8xf32>
    %47 = tpu.matmul %44, %45, %cst_20 {dimension_numbers = #tpu.dot_dimension_numbers<[1], [1], [0], [0], [0, 0, 1, 0], [], []>} : vector<8x64xbf16>, vector<8x64xbf16>, vector<8x8xf32> -> vector<8x8xf32>
    "tpu.trace_stop"() : () -> ()
    %cst_21 = arith.constant dense<0xFF800000> : vector<8xf32>
    %48 = vector.multi_reduction <maximumf>, %47, %cst_21 [1] : vector<8x8xf32> to vector<8xf32>
    %49 = vector.shape_cast %48 : vector<8xf32> to vector<8x1xf32>
    %50 = vector.broadcast %49 : vector<8x1xf32> to vector<8x8xf32>
    %51 = arith.subf %47, %50 : vector<8x8xf32>
    %52 = math.exp %51 : vector<8x8xf32>
    %cst_22 = arith.constant dense<0.000000e+00> : vector<8xf32>
    %53 = vector.multi_reduction <add>, %52, %cst_22 [1] : vector<8x8xf32> to vector<8xf32>
    %54 = vector.shape_cast %53 : vector<8xf32> to vector<8x1xf32>
    %55 = tpu.reciprocal %54 {approx = true} : vector<8x1xf32> -> vector<8x1xf32>
    %56 = vector.broadcast %55 : vector<8x1xf32> to vector<8x8xf32>
    %57 = arith.mulf %52, %56 : vector<8x8xf32>
    %58 = arith.truncf %57 : vector<8x8xf32> to vector<8x8xbf16>
    "tpu.trace_start"() <{level = 10 : i32, message = "qk,kd->qd"}> : () -> ()
    %cst_23 = arith.constant dense<0.000000e+00> : vector<8x64xf32>
    %59 = tpu.matmul %58, %46, %cst_23 {dimension_numbers = #tpu.dot_dimension_numbers<[1], [0], [0], [1], [0, 0, 1, 1], [], []>} : vector<8x8xbf16>, vector<8x64xbf16>, vector<8x64xf32> -> vector<8x64xf32>
    "tpu.trace_stop"() : () -> ()
    %60 = arith.truncf %59 : vector<8x64xf32> to vector<8x64xbf16>
    %c0_24 = arith.constant 0 : index
    %c0_25 = arith.constant 0 : index
    %c0_26 = arith.constant 0 : index
    %61 = vector.load %arg8[%c0_24, %c0_25, %c0_26] : memref<2x64x64xbf16, #tpu.memory_space<vmem>>, vector<1x64x64xbf16>
    %62 = vector.shape_cast %61 : vector<1x64x64xbf16> to vector<64x64xbf16>
    %cst_27 = arith.constant dense<0.000000e+00> : vector<8x64xf32>
    %63 = tpu.matmul %60, %62, %cst_27 {dimension_numbers = #tpu.dot_dimension_numbers<[1], [0], [0], [1], [0, 0, 1, 1], [], []>} : vector<8x64xbf16>, vector<64x64xbf16>, vector<8x64xf32> -> vector<8x64xf32>
    %64 = arith.addf %6, %63 : vector<8x64xf32>
    %c1 = arith.constant 1 : index
    %c0_28 = arith.constant 0 : index
    %c0_29 = arith.constant 0 : index
    %65 = vector.load %arg6[%c1, %c0_28, %c0_29] : memref<4x1x64xf32, #tpu.memory_space<vmem>>, vector<1x1x64xf32>
    %66 = vector.shape_cast %65 : vector<1x1x64xf32> to vector<1x64xf32>
    %cst_30 = arith.constant dense<0.000000e+00> : vector<8xf32>
    %67 = vector.multi_reduction <add>, %64, %cst_30 [1] : vector<8x64xf32> to vector<8xf32>
    %68 = vector.shape_cast %67 : vector<8xf32> to vector<8x1xf32>
    %cst_31 = arith.constant 6.400000e+01 : f32
    %69 = vector.broadcast %cst_31 : f32 to vector<8x1xf32>
    %70 = arith.divf %68, %69 : vector<8x1xf32>
    %71 = vector.broadcast %70 : vector<8x1xf32> to vector<8x64xf32>
    %72 = arith.subf %64, %71 : vector<8x64xf32>
    %73 = arith.mulf %72, %72 : vector<8x64xf32>
    %cst_32 = arith.constant dense<0.000000e+00> : vector<8xf32>
    %74 = vector.multi_reduction <add>, %73, %cst_32 [1] : vector<8x64xf32> to vector<8xf32>
    %75 = vector.shape_cast %74 : vector<8xf32> to vector<8x1xf32>
    %cst_33 = arith.constant 6.400000e+01 : f32
    %76 = vector.broadcast %cst_33 : f32 to vector<8x1xf32>
    %77 = arith.divf %75, %76 : vector<8x1xf32>
    %78 = vector.broadcast %70 : vector<8x1xf32> to vector<8x64xf32>
    %79 = arith.subf %64, %78 : vector<8x64xf32>
    %cst_34 = arith.constant 9.99999974E-6 : f32
    %80 = vector.broadcast %cst_34 : f32 to vector<8x1xf32>
    %81 = arith.addf %77, %80 : vector<8x1xf32>
    %82 = math.rsqrt %81 : vector<8x1xf32>
    %83 = vector.broadcast %82 : vector<8x1xf32> to vector<8x64xf32>
    %84 = arith.mulf %79, %83 : vector<8x64xf32>
    %85 = vector.broadcast %66 : vector<1x64xf32> to vector<8x64xf32>
    %86 = arith.mulf %84, %85 : vector<8x64xf32>
    %87 = arith.truncf %86 : vector<8x64xf32> to vector<8x64xbf16>
    %c0_35 = arith.constant 0 : index
    %c0_36 = arith.constant 0 : index
    %c0_37 = arith.constant 0 : index
    %88 = vector.load %arg9[%c0_35, %c0_36, %c0_37] : memref<2x64x512xbf16, #tpu.memory_space<vmem>>, vector<1x64x512xbf16>
    %89 = vector.shape_cast %88 : vector<1x64x512xbf16> to vector<64x512xbf16>
    %cst_38 = arith.constant dense<0.000000e+00> : vector<8x512xf32>
    %90 = tpu.matmul %87, %89, %cst_38 {dimension_numbers = #tpu.dot_dimension_numbers<[1], [0], [0], [1], [0, 0, 1, 1], [], []>} : vector<8x64xbf16>, vector<64x512xbf16>, vector<8x512xf32> -> vector<8x512xf32>
    %c0_39 = arith.constant 0 : index
    %c0_40 = arith.constant 0 : index
    %c0_41 = arith.constant 0 : index
    %91 = vector.load %arg10[%c0_39, %c0_40, %c0_41] : memref<2x1x512xf32, #tpu.memory_space<vmem>>, vector<1x1x512xf32>
    %92 = vector.shape_cast %91 : vector<1x1x512xf32> to vector<1x512xf32>
    %93 = vector.broadcast %92 : vector<1x512xf32> to vector<8x512xf32>
    %94 = arith.addf %90, %93 : vector<8x512xf32>
    %95 = vector.extract_strided_slice %94 {offsets = [0, 0], sizes = [8, 256], strides = [1, 1]} : vector<8x512xf32> to vector<8x256xf32>
    %96 = vector.extract_strided_slice %94 {offsets = [0, 256], sizes = [8, 256], strides = [1, 1]} : vector<8x512xf32> to vector<8x256xf32>
    %97 = arith.negf %96 : vector<8x256xf32>
    %98 = math.exp %97 : vector<8x256xf32>
    %cst_42 = arith.constant 1.000000e+00 : f32
    %99 = vector.broadcast %cst_42 : f32 to vector<8x256xf32>
    %100 = arith.addf %99, %98 : vector<8x256xf32>
    %101 = arith.divf %99, %100 : vector<8x256xf32>
    %102 = arith.mulf %96, %101 : vector<8x256xf32>
    %103 = arith.mulf %95, %102 : vector<8x256xf32>
    %104 = arith.truncf %103 : vector<8x256xf32> to vector<8x256xbf16>
    %c0_43 = arith.constant 0 : index
    %c0_44 = arith.constant 0 : index
    %c0_45 = arith.constant 0 : index
    %105 = vector.load %arg11[%c0_43, %c0_44, %c0_45] : memref<2x256x64xbf16, #tpu.memory_space<vmem>>, vector<1x256x64xbf16>
    %106 = vector.shape_cast %105 : vector<1x256x64xbf16> to vector<256x64xbf16>
    %cst_46 = arith.constant dense<0.000000e+00> : vector<8x64xf32>
    %107 = tpu.matmul %104, %106, %cst_46 {dimension_numbers = #tpu.dot_dimension_numbers<[1], [0], [0], [1], [0, 0, 1, 1], [], []>} : vector<8x256xbf16>, vector<256x64xbf16>, vector<8x64xf32> -> vector<8x64xf32>
    %108 = arith.addf %64, %107 : vector<8x64xf32>
    %c0_47 = arith.constant 0 : index
    %c0_48 = arith.constant 0 : index
    %c0_49 = arith.constant 0 : index
    %109 = vector.load %arg12[%c0_47, %c0_48, %c0_49] : memref<2x1x64xf32, #tpu.memory_space<vmem>>, vector<1x1x64xf32>
    %110 = vector.shape_cast %109 : vector<1x1x64xf32> to vector<1x64xf32>
    %111 = vector.broadcast %110 : vector<1x64xf32> to vector<8x64xf32>
    %112 = arith.addf %108, %111 : vector<8x64xf32>
    %c2 = arith.constant 2 : index
    %c0_50 = arith.constant 0 : index
    %c0_51 = arith.constant 0 : index
    %113 = vector.load %arg6[%c2, %c0_50, %c0_51] : memref<4x1x64xf32, #tpu.memory_space<vmem>>, vector<1x1x64xf32>
    %114 = vector.shape_cast %113 : vector<1x1x64xf32> to vector<1x64xf32>
    %cst_52 = arith.constant dense<0.000000e+00> : vector<8xf32>
    %115 = vector.multi_reduction <add>, %112, %cst_52 [1] : vector<8x64xf32> to vector<8xf32>
    %116 = vector.shape_cast %115 : vector<8xf32> to vector<8x1xf32>
    %cst_53 = arith.constant 6.400000e+01 : f32
    %117 = vector.broadcast %cst_53 : f32 to vector<8x1xf32>
    %118 = arith.divf %116, %117 : vector<8x1xf32>
    %119 = vector.broadcast %118 : vector<8x1xf32> to vector<8x64xf32>
    %120 = arith.subf %112, %119 : vector<8x64xf32>
    %121 = arith.mulf %120, %120 : vector<8x64xf32>
    %cst_54 = arith.constant dense<0.000000e+00> : vector<8xf32>
    %122 = vector.multi_reduction <add>, %121, %cst_54 [1] : vector<8x64xf32> to vector<8xf32>
    %123 = vector.shape_cast %122 : vector<8xf32> to vector<8x1xf32>
    %cst_55 = arith.constant 6.400000e+01 : f32
    %124 = vector.broadcast %cst_55 : f32 to vector<8x1xf32>
    %125 = arith.divf %123, %124 : vector<8x1xf32>
    %126 = vector.broadcast %118 : vector<8x1xf32> to vector<8x64xf32>
    %127 = arith.subf %112, %126 : vector<8x64xf32>
    %cst_56 = arith.constant 9.99999974E-6 : f32
    %128 = vector.broadcast %cst_56 : f32 to vector<8x1xf32>
    %129 = arith.addf %125, %128 : vector<8x1xf32>
    %130 = math.rsqrt %129 : vector<8x1xf32>
    %131 = vector.broadcast %130 : vector<8x1xf32> to vector<8x64xf32>
    %132 = arith.mulf %127, %131 : vector<8x64xf32>
    %133 = vector.broadcast %114 : vector<1x64xf32> to vector<8x64xf32>
    %134 = arith.mulf %132, %133 : vector<8x64xf32>
    %135 = arith.truncf %134 : vector<8x64xf32> to vector<8x64xbf16>
    %c1_57 = arith.constant 1 : index
    %c0_58 = arith.constant 0 : index
    %c0_59 = arith.constant 0 : index
    %136 = vector.load %arg7[%c1_57, %c0_58, %c0_59] : memref<2x64x320xbf16, #tpu.memory_space<vmem>>, vector<1x64x320xbf16>
    %137 = vector.shape_cast %136 : vector<1x64x320xbf16> to vector<64x320xbf16>
    %cst_60 = arith.constant dense<0.000000e+00> : vector<8x320xf32>
    %138 = tpu.matmul %135, %137, %cst_60 {dimension_numbers = #tpu.dot_dimension_numbers<[1], [0], [0], [1], [0, 0, 1, 1], [], []>} : vector<8x64xbf16>, vector<64x320xbf16>, vector<8x320xf32> -> vector<8x320xf32>
    %139 = vector.extract_strided_slice %138 {offsets = [0, 0], sizes = [8, 64], strides = [1, 1]} : vector<8x320xf32> to vector<8x64xf32>
    %140 = arith.mulf %139, %0 : vector<8x64xf32>
    %141 = vector.extract_strided_slice %138 {offsets = [0, 64], sizes = [8, 64], strides = [1, 1]} : vector<8x320xf32> to vector<8x64xf32>
    %142 = arith.mulf %141, %1 : vector<8x64xf32>
    %143 = arith.addf %140, %142 : vector<8x64xf32>
    %144 = vector.extract_strided_slice %138 {offsets = [0, 128], sizes = [8, 64], strides = [1, 1]} : vector<8x320xf32> to vector<8x64xf32>
    %145 = arith.mulf %144, %0 : vector<8x64xf32>
    %146 = vector.extract_strided_slice %138 {offsets = [0, 192], sizes = [8, 64], strides = [1, 1]} : vector<8x320xf32> to vector<8x64xf32>
    %147 = arith.mulf %146, %1 : vector<8x64xf32>
    %148 = arith.addf %145, %147 : vector<8x64xf32>
    %149 = vector.extract_strided_slice %138 {offsets = [0, 256], sizes = [8, 64], strides = [1, 1]} : vector<8x320xf32> to vector<8x64xf32>
    %150 = arith.truncf %143 : vector<8x64xf32> to vector<8x64xbf16>
    %151 = arith.truncf %148 : vector<8x64xf32> to vector<8x64xbf16>
    %152 = arith.truncf %149 : vector<8x64xf32> to vector<8x64xbf16>
    "tpu.trace_start"() <{level = 10 : i32, message = "qd,kd->qk"}> : () -> ()
    %cst_61 = arith.constant dense<0.000000e+00> : vector<8x8xf32>
    %153 = tpu.matmul %150, %151, %cst_61 {dimension_numbers = #tpu.dot_dimension_numbers<[1], [1], [0], [0], [0, 0, 1, 0], [], []>} : vector<8x64xbf16>, vector<8x64xbf16>, vector<8x8xf32> -> vector<8x8xf32>
    "tpu.trace_stop"() : () -> ()
    %cst_62 = arith.constant dense<0xFF800000> : vector<8xf32>
    %154 = vector.multi_reduction <maximumf>, %153, %cst_62 [1] : vector<8x8xf32> to vector<8xf32>
    %155 = vector.shape_cast %154 : vector<8xf32> to vector<8x1xf32>
    %156 = vector.broadcast %155 : vector<8x1xf32> to vector<8x8xf32>
    %157 = arith.subf %153, %156 : vector<8x8xf32>
    %158 = math.exp %157 : vector<8x8xf32>
    %cst_63 = arith.constant dense<0.000000e+00> : vector<8xf32>
    %159 = vector.multi_reduction <add>, %158, %cst_63 [1] : vector<8x8xf32> to vector<8xf32>
    %160 = vector.shape_cast %159 : vector<8xf32> to vector<8x1xf32>
    %161 = tpu.reciprocal %160 {approx = true} : vector<8x1xf32> -> vector<8x1xf32>
    %162 = vector.broadcast %161 : vector<8x1xf32> to vector<8x8xf32>
    %163 = arith.mulf %158, %162 : vector<8x8xf32>
    %164 = arith.truncf %163 : vector<8x8xf32> to vector<8x8xbf16>
    "tpu.trace_start"() <{level = 10 : i32, message = "qk,kd->qd"}> : () -> ()
    %cst_64 = arith.constant dense<0.000000e+00> : vector<8x64xf32>
    %165 = tpu.matmul %164, %152, %cst_64 {dimension_numbers = #tpu.dot_dimension_numbers<[1], [0], [0], [1], [0, 0, 1, 1], [], []>} : vector<8x8xbf16>, vector<8x64xbf16>, vector<8x64xf32> -> vector<8x64xf32>
    "tpu.trace_stop"() : () -> ()
    %166 = arith.truncf %165 : vector<8x64xf32> to vector<8x64xbf16>
    %c1_65 = arith.constant 1 : index
    %c0_66 = arith.constant 0 : index
    %c0_67 = arith.constant 0 : index
    %167 = vector.load %arg8[%c1_65, %c0_66, %c0_67] : memref<2x64x64xbf16, #tpu.memory_space<vmem>>, vector<1x64x64xbf16>
    %168 = vector.shape_cast %167 : vector<1x64x64xbf16> to vector<64x64xbf16>
    %cst_68 = arith.constant dense<0.000000e+00> : vector<8x64xf32>
    %169 = tpu.matmul %166, %168, %cst_68 {dimension_numbers = #tpu.dot_dimension_numbers<[1], [0], [0], [1], [0, 0, 1, 1], [], []>} : vector<8x64xbf16>, vector<64x64xbf16>, vector<8x64xf32> -> vector<8x64xf32>
    %170 = arith.addf %112, %169 : vector<8x64xf32>
    %c3 = arith.constant 3 : index
    %c0_69 = arith.constant 0 : index
    %c0_70 = arith.constant 0 : index
    %171 = vector.load %arg6[%c3, %c0_69, %c0_70] : memref<4x1x64xf32, #tpu.memory_space<vmem>>, vector<1x1x64xf32>
    %172 = vector.shape_cast %171 : vector<1x1x64xf32> to vector<1x64xf32>
    %cst_71 = arith.constant dense<0.000000e+00> : vector<8xf32>
    %173 = vector.multi_reduction <add>, %170, %cst_71 [1] : vector<8x64xf32> to vector<8xf32>
    %174 = vector.shape_cast %173 : vector<8xf32> to vector<8x1xf32>
    %cst_72 = arith.constant 6.400000e+01 : f32
    %175 = vector.broadcast %cst_72 : f32 to vector<8x1xf32>
    %176 = arith.divf %174, %175 : vector<8x1xf32>
    %177 = vector.broadcast %176 : vector<8x1xf32> to vector<8x64xf32>
    %178 = arith.subf %170, %177 : vector<8x64xf32>
    %179 = arith.mulf %178, %178 : vector<8x64xf32>
    %cst_73 = arith.constant dense<0.000000e+00> : vector<8xf32>
    %180 = vector.multi_reduction <add>, %179, %cst_73 [1] : vector<8x64xf32> to vector<8xf32>
    %181 = vector.shape_cast %180 : vector<8xf32> to vector<8x1xf32>
    %cst_74 = arith.constant 6.400000e+01 : f32
    %182 = vector.broadcast %cst_74 : f32 to vector<8x1xf32>
    %183 = arith.divf %181, %182 : vector<8x1xf32>
    %184 = vector.broadcast %176 : vector<8x1xf32> to vector<8x64xf32>
    %185 = arith.subf %170, %184 : vector<8x64xf32>
    %cst_75 = arith.constant 9.99999974E-6 : f32
    %186 = vector.broadcast %cst_75 : f32 to vector<8x1xf32>
    %187 = arith.addf %183, %186 : vector<8x1xf32>
    %188 = math.rsqrt %187 : vector<8x1xf32>
    %189 = vector.broadcast %188 : vector<8x1xf32> to vector<8x64xf32>
    %190 = arith.mulf %185, %189 : vector<8x64xf32>
    %191 = vector.broadcast %172 : vector<1x64xf32> to vector<8x64xf32>
    %192 = arith.mulf %190, %191 : vector<8x64xf32>
    %193 = arith.truncf %192 : vector<8x64xf32> to vector<8x64xbf16>
    %c1_76 = arith.constant 1 : index
    %c0_77 = arith.constant 0 : index
    %c0_78 = arith.constant 0 : index
    %194 = vector.load %arg9[%c1_76, %c0_77, %c0_78] : memref<2x64x512xbf16, #tpu.memory_space<vmem>>, vector<1x64x512xbf16>
    %195 = vector.shape_cast %194 : vector<1x64x512xbf16> to vector<64x512xbf16>
    %cst_79 = arith.constant dense<0.000000e+00> : vector<8x512xf32>
    %196 = tpu.matmul %193, %195, %cst_79 {dimension_numbers = #tpu.dot_dimension_numbers<[1], [0], [0], [1], [0, 0, 1, 1], [], []>} : vector<8x64xbf16>, vector<64x512xbf16>, vector<8x512xf32> -> vector<8x512xf32>
    %c1_80 = arith.constant 1 : index
    %c0_81 = arith.constant 0 : index
    %c0_82 = arith.constant 0 : index
    %197 = vector.load %arg10[%c1_80, %c0_81, %c0_82] : memref<2x1x512xf32, #tpu.memory_space<vmem>>, vector<1x1x512xf32>
    %198 = vector.shape_cast %197 : vector<1x1x512xf32> to vector<1x512xf32>
    %199 = vector.broadcast %198 : vector<1x512xf32> to vector<8x512xf32>
    %200 = arith.addf %196, %199 : vector<8x512xf32>
    %201 = vector.extract_strided_slice %200 {offsets = [0, 0], sizes = [8, 256], strides = [1, 1]} : vector<8x512xf32> to vector<8x256xf32>
    %202 = vector.extract_strided_slice %200 {offsets = [0, 256], sizes = [8, 256], strides = [1, 1]} : vector<8x512xf32> to vector<8x256xf32>
    %203 = arith.negf %202 : vector<8x256xf32>
    %204 = math.exp %203 : vector<8x256xf32>
    %cst_83 = arith.constant 1.000000e+00 : f32
    %205 = vector.broadcast %cst_83 : f32 to vector<8x256xf32>
    %206 = arith.addf %205, %204 : vector<8x256xf32>
    %207 = arith.divf %205, %206 : vector<8x256xf32>
    %208 = arith.mulf %202, %207 : vector<8x256xf32>
    %209 = arith.mulf %201, %208 : vector<8x256xf32>
    %210 = arith.truncf %209 : vector<8x256xf32> to vector<8x256xbf16>
    %c1_84 = arith.constant 1 : index
    %c0_85 = arith.constant 0 : index
    %c0_86 = arith.constant 0 : index
    %211 = vector.load %arg11[%c1_84, %c0_85, %c0_86] : memref<2x256x64xbf16, #tpu.memory_space<vmem>>, vector<1x256x64xbf16>
    %212 = vector.shape_cast %211 : vector<1x256x64xbf16> to vector<256x64xbf16>
    %cst_87 = arith.constant dense<0.000000e+00> : vector<8x64xf32>
    %213 = tpu.matmul %210, %212, %cst_87 {dimension_numbers = #tpu.dot_dimension_numbers<[1], [0], [0], [1], [0, 0, 1, 1], [], []>} : vector<8x256xbf16>, vector<256x64xbf16>, vector<8x64xf32> -> vector<8x64xf32>
    %214 = arith.addf %170, %213 : vector<8x64xf32>
    %c1_88 = arith.constant 1 : index
    %c0_89 = arith.constant 0 : index
    %c0_90 = arith.constant 0 : index
    %215 = vector.load %arg12[%c1_88, %c0_89, %c0_90] : memref<2x1x64xf32, #tpu.memory_space<vmem>>, vector<1x1x64xf32>
    %216 = vector.shape_cast %215 : vector<1x1x64xf32> to vector<1x64xf32>
    %217 = vector.broadcast %216 : vector<1x64xf32> to vector<8x64xf32>
    %218 = arith.addf %214, %217 : vector<8x64xf32>
    %219 = arith.truncf %218 : vector<8x64xf32> to vector<8x64xbf16>
    %c0_91 = arith.constant 0 : index
    %c0_92 = arith.constant 0 : index
    %220 = vector.load %arg5[%c0_91, %c0_92] : memref<64x128xbf16, #tpu.memory_space<vmem>>, vector<64x128xbf16>
    %cst_93 = arith.constant dense<0.000000e+00> : vector<8x128xf32>
    %221 = tpu.matmul %219, %220, %cst_93 {dimension_numbers = #tpu.dot_dimension_numbers<[1], [0], [0], [1], [0, 0, 1, 1], [], []>} : vector<8x64xbf16>, vector<64x128xbf16>, vector<8x128xf32> -> vector<8x128xf32>
    %c0_94 = arith.constant 0 : index
    %c0_95 = arith.constant 0 : index
    %c0_96 = arith.constant 0 : index
    %222 = vector.load %arg13[%c0_94, %c0_95, %c0_96] : memref<1x8x128xf32, #tpu.memory_space<vmem>>, vector<1x8x128xf32>
    %223 = vector.shape_cast %222 : vector<1x8x128xf32> to vector<8x128xf32>
    %224 = vector.shape_cast %221 : vector<8x128xf32> to vector<1x8x128xf32>
    tpu.vector_store %arg13[%c0_94, %c0_95, %c0_96], %224 {strides = array<i32>} : memref<1x8x128xf32, #tpu.memory_space<vmem>>, vector<1x8x128xf32>,
    return
  }
  func.func @transform_0(%arg0: i32) -> (i32, i32, i32) {
    %c0_i32 = arith.constant 0 : i32
    %c0_i32_0 = arith.constant 0 : i32
    %c0_i32_1 = arith.constant 0 : i32
    return %arg0, %c0_i32, %c0_i32_0 : i32, i32, i32
  }
  func.func @transform_1(%arg0: i32) -> (i32, i32) {
    %c0_i32 = arith.constant 0 : i32
    %c0_i32_0 = arith.constant 0 : i32
    %c0_i32_1 = arith.constant 0 : i32
    return %c0_i32, %c0_i32_0 : i32, i32
  }
  func.func @transform_2(%arg0: i32) -> (i32, i32) {
    %c0_i32 = arith.constant 0 : i32
    %c0_i32_0 = arith.constant 0 : i32
    %c0_i32_1 = arith.constant 0 : i32
    return %c0_i32, %c0_i32_0 : i32, i32
  }
  func.func @transform_3(%arg0: i32) -> (i32, i32) {
    %c0_i32 = arith.constant 0 : i32
    %c0_i32_0 = arith.constant 0 : i32
    %c0_i32_1 = arith.constant 0 : i32
    return %c0_i32, %c0_i32_0 : i32, i32
  }
  func.func @transform_4(%arg0: i32) -> (i32, i32) {
    %c0_i32 = arith.constant 0 : i32
    %c0_i32_0 = arith.constant 0 : i32
    %c0_i32_1 = arith.constant 0 : i32
    return %c0_i32, %c0_i32_0 : i32, i32
  }
  func.func @transform_5(%arg0: i32) -> (i32, i32, i32) {
    %c0_i32 = arith.constant 0 : i32
    %c0_i32_0 = arith.constant 0 : i32
    %c0_i32_1 = arith.constant 0 : i32
    %c0_i32_2 = arith.constant 0 : i32
    return %c0_i32, %c0_i32_0, %c0_i32_1 : i32, i32, i32
  }
  func.func @transform_6(%arg0: i32) -> (i32, i32, i32) {
    %c0_i32 = arith.constant 0 : i32
    %c0_i32_0 = arith.constant 0 : i32
    %c0_i32_1 = arith.constant 0 : i32
    %c0_i32_2 = arith.constant 0 : i32
    return %c0_i32, %c0_i32_0, %c0_i32_1 : i32, i32, i32
  }
  func.func @transform_7(%arg0: i32) -> (i32, i32, i32) {
    %c0_i32 = arith.constant 0 : i32
    %c0_i32_0 = arith.constant 0 : i32
    %c0_i32_1 = arith.constant 0 : i32
    %c0_i32_2 = arith.constant 0 : i32
    return %c0_i32, %c0_i32_0, %c0_i32_1 : i32, i32, i32
  }
  func.func @transform_8(%arg0: i32) -> (i32, i32, i32) {
    %c0_i32 = arith.constant 0 : i32
    %c0_i32_0 = arith.constant 0 : i32
    %c0_i32_1 = arith.constant 0 : i32
    %c0_i32_2 = arith.constant 0 : i32
    return %c0_i32, %c0_i32_0, %c0_i32_1 : i32, i32, i32
  }
  func.func @transform_9(%arg0: i32) -> (i32, i32, i32) {
    %c0_i32 = arith.constant 0 : i32
    %c0_i32_0 = arith.constant 0 : i32
    %c0_i32_1 = arith.constant 0 : i32
    %c0_i32_2 = arith.constant 0 : i32
    return %c0_i32, %c0_i32_0, %c0_i32_1 : i32, i32, i32
  }
  func.func @transform_10(%arg0: i32) -> (i32, i32, i32) {
    %c0_i32 = arith.constant 0 : i32
    %c0_i32_0 = arith.constant 0 : i32
    %c0_i32_1 = arith.constant 0 : i32
    %c0_i32_2 = arith.constant 0 : i32
    return %c0_i32, %c0_i32_0, %c0_i32_1 : i32, i32, i32
  }
  func.func @transform_11(%arg0: i32) -> (i32, i32, i32) {
    %c0_i32 = arith.constant 0 : i32
    %c0_i32_0 = arith.constant 0 : i32
    %c0_i32_1 = arith.constant 0 : i32
    %c0_i32_2 = arith.constant 0 : i32
    return %c0_i32, %c0_i32_0, %c0_i32_1 : i32, i32, i32
  }
  func.func @transform_12(%arg0: i32) -> (i32, i32, i32) {
    %c0_i32 = arith.constant 0 : i32
    %c0_i32_0 = arith.constant 0 : i32
    %c0_i32_1 = arith.constant 0 : i32
    return %arg0, %c0_i32, %c0_i32_0 : i32, i32, i32
  }
}

</mosaic_0001>

<llo_original>
// kernel: continuous_transformer_forward.1
$region0: #{continuous_transformer_forward.1}
  #allocation0 [shape = 'u32[]', space=smem, size = 0x4, offset = 0x4, fixed_abs, tag = 'smem constant byte address 0x4 - core index']
  #allocation1 [shape = 'u32[144,128]{1,0:T(1,128)}', space=vmem, size = 0x12000, scoped, tag = 'internal scratch']
  %s0 = inlined_call_operand.vmem [shape: f32[2,8,32], index: 0, kind: input, shape index: {}]
  %s1 = inlined_call_operand.vmem [shape: f32[8,64], index: 1, kind: input, shape index: {}]
  %s2 = inlined_call_operand.vmem [shape: f32[8,64], index: 2, kind: input, shape index: {}]
  %s3 = inlined_call_operand.vmem [shape: bf16[32,64], index: 3, kind: input, shape index: {}]
  %s4 = inlined_call_operand.vmem [shape: bf16[64,128], index: 4, kind: input, shape index: {}]
  %s5 = inlined_call_operand.vmem [shape: f32[4,1,64], index: 5, kind: input, shape index: {}]
  %s6 = inlined_call_operand.vmem [shape: bf16[2,64,320], index: 6, kind: input, shape index: {}]
  %s7 = inlined_call_operand.vmem [shape: bf16[2,64,64], index: 7, kind: input, shape index: {}]
  %s8 = inlined_call_operand.vmem [shape: bf16[2,64,512], index: 8, kind: input, shape index: {}]
  %s9 = inlined_call_operand.vmem [shape: f32[2,1,512], index: 9, kind: input, shape index: {}]
  %s10 = inlined_call_operand.vmem [shape: bf16[2,256,64], index: 10, kind: input, shape index: {}]
  %s11 = inlined_call_operand.vmem [shape: f32[2,1,64], index: 11, kind: input, shape index: {}]
  %s12 = inlined_call_operand.hbm [shape: f32[2,8,128], index: 12, kind: output, shape index: {}]
  %s13 = sld [smem:[#allocation0]]
  $region81: #{continuous_transformer_forward.1} parent=0
    _
  %s15 = ssub.s32 1, %s13
  %s16 = scalar_select 0, %s15, %s13
  $region1: #{continuous_transformer_forward.1} parent=0
    #allocation2 [shape = 'u8[8192]{0}', space=vmem, size = 0x2000, scoped, tag = 'output window, operand 0']
    #allocation3 [shape = 's32[2]{0}', space=sflag, size = 0x8, scoped, tag = 'scoped memory for continuous_transformer_forward.1']
    %17 = vsyncpa [#allocation3], 0
    %s18 = scalar_lea.sflag [#allocation3], 1
    %19 = vsyncpa %s18, 0
    loop: start=0, step=1, limit=4
    $region2: #{continuous_transformer_forward.1} parent=1 // loop_pre_header
      _
    $region3: #{continuous_transformer_forward.1} parent=1 // loop_header
      %s21 = sphi 0, %s25
      %p22 = scmp.ge.s32.totalorder %s21, 4
      %s31 = sphi 0, %s33
      %s34 = sphi 0, %s31
      %s35 = sphi 0, %s34
      %s51 = sphi 0, %s35
      %s55 = sphi 0, %s55
      %s57 = sphi 0, %s55
      %s58 = sphi 0, %s57
      %s72 = sphi 0, %s58
      %s76 = sphi 0, %s76
      %s78 = sphi 0, %s76
      %s79 = sphi 0, %s78
      %s93 = sphi 0, %s79
      %s97 = sphi 0, %s97
      %s99 = sphi 0, %s97
      %s100 = sphi 0, %s99
      %s114 = sphi 0, %s100
      %s118 = sphi 0, %s118
      %s120 = sphi 0, %s118
      %s121 = sphi 0, %s120
      %s135 = sphi 0, %s121
      %s139 = sphi 0, %s139
      %s141 = sphi 0, %s139
      %s142 = sphi 0, %s141
      %s156 = sphi 0, %s142
      %s160 = sphi 0, %s160
      %s162 = sphi 0, %s160
      %s163 = sphi 0, %s162
      %s177 = sphi 0, %s163
      %s181 = sphi 0, %s181
      %s183 = sphi 0, %s181
      %s184 = sphi 0, %s183
      %s198 = sphi 0, %s184
      %s202 = sphi 0, %s202
      %s204 = sphi 0, %s202
      %s205 = sphi 0, %s204
      %s219 = sphi 0, %s205
      %s223 = sphi 0, %s223
      %s225 = sphi 0, %s223
      %s226 = sphi 0, %s225
      %s240 = sphi 0, %s226
      %s244 = sphi 0, %s244
      %s246 = sphi 0, %s244
      %s247 = sphi 0, %s246
      %s261 = sphi 0, %s247
      %s265 = sphi 0, %s265
      %s267 = sphi 0, %s265
      %s268 = sphi 0, %s267
      %s282 = sphi 0, %s268
      %s288 = sphi 0, %s290
      %s291 = sphi 0, %s288
      %s292 = sphi 0, %s291
      %s308 = sphi 0, %s292
    $region4: #{continuous_transformer_forward.1} parent=1 // loop_header_branch
      %24 = sbr.rel (%p22) target = $region8
    $region5: #{continuous_transformer_forward.1} parent=1 // loop_body
      %s26 = ssub.s32 %s21, 1
      %s27 = ssub.s32 %s21, 2
      %s28 = sadd.s32 %s21, 1
      %s29 = ssub.s32 %s21, %s28
      %p30 = scmp.eq.s32.totalorder %s29, 0
      %s32 = sadd.s32 %s31, 1
      %s33 = scalar_select %p30, %s31, %s32
      %p36 = pneg %p30
      %p37 = scmp.eq.s32.totalorder %s21, 1
      %p38 = por %p36, %p37
      %p39 = scmp.ne.s32.totalorder %s31, %s34
      %p40 = scmp.eq.s32.totalorder %s21, 0
      %p41 = por %p39, %p40
      %p42 = scmp.ne.s32.totalorder %s31, %s34
      %p43 = scmp.eq.s32.totalorder %s26, 1
      %p44 = por %p42, %p43
      %p45 = scmp.ne.s32.totalorder %s34, %s35
      %p46 = scmp.eq.s32.totalorder %s26, 0
      %p47 = por %p45, %p46
      %p48 = scmp.ne.s32.totalorder %s34, %s35
      %p49 = scmp.eq.s32.totalorder %s27, 1
      %p50 = por %p48, %p49
      %p52 = scmp.ne.s32.totalorder %s35, %s51
      %p53 = scmp.eq.s32.totalorder %s27, 0
      %p54 = por %p52, %p53
      %s56 = sadd.s32 %s55, 1
      %p59 = scmp.eq.s32.totalorder %s21, 1
      %p60 = scmp.ne.s32.totalorder %s55, %s57
      %p61 = scmp.eq.s32.totalorder %s21, 0
      %p62 = por %p60, %p61
      %p63 = scmp.ne.s32.totalorder %s55, %s57
      %p64 = scmp.eq.s32.totalorder %s26, 1
      %p65 = por %p63, %p64
      %p66 = scmp.ne.s32.totalorder %s57, %s58
      %p67 = scmp.eq.s32.totalorder %s26, 0
      %p68 = por %p66, %p67
      %p69 = scmp.ne.s32.totalorder %s57, %s58
      %p70 = scmp.eq.s32.totalorder %s27, 1
      %p71 = por %p69, %p70
      %p73 = scmp.ne.s32.totalorder %s58, %s72
      %p74 = scmp.eq.s32.totalorder %s27, 0
      %p75 = por %p73, %p74
      %s77 = sadd.s32 %s76, 1
      %p80 = scmp.eq.s32.totalorder %s21, 1
      %p81 = scmp.ne.s32.totalorder %s76, %s78
      %p82 = scmp.eq.s32.totalorder %s21, 0
      %p83 = por %p81, %p82
      %p84 = scmp.ne.s32.totalorder %s76, %s78
      %p85 = scmp.eq.s32.totalorder %s26, 1
      %p86 = por %p84, %p85
      %p87 = scmp.ne.s32.totalorder %s78, %s79
      %p88 = scmp.eq.s32.totalorder %s26, 0
      %p89 = por %p87, %p88
      %p90 = scmp.ne.s32.totalorder %s78, %s79
      %p91 = scmp.eq.s32.totalorder %s27, 1
      %p92 = por %p90, %p91
      %p94 = scmp.ne.s32.totalorder %s79, %s93
      %p95 = scmp.eq.s32.totalorder %s27, 0
      %p96 = por %p94, %p95
      %s98 = sadd.s32 %s97, 1
      %p101 = scmp.eq.s32.totalorder %s21, 1
      %p102 = scmp.ne.s32.totalorder %s97, %s99
      %p103 = scmp.eq.s32.totalorder %s21, 0
      %p104 = por %p102, %p103
      %p105 = scmp.ne.s32.totalorder %s97, %s99
      %p106 = scmp.eq.s32.totalorder %s26, 1
      %p107 = por %p105, %p106
      %p108 = scmp.ne.s32.totalorder %s99, %s100
      %p109 = scmp.eq.s32.totalorder %s26, 0
      %p110 = por %p108, %p109
      %p111 = scmp.ne.s32.totalorder %s99, %s100
      %p112 = scmp.eq.s32.totalorder %s27, 1
      %p113 = por %p111, %p112
      %p115 = scmp.ne.s32.totalorder %s100, %s114
      %p116 = scmp.eq.s32.totalorder %s27, 0
      %p117 = por %p115, %p116
      %s119 = sadd.s32 %s118, 1
      %p122 = scmp.eq.s32.totalorder %s21, 1
      %p123 = scmp.ne.s32.totalorder %s118, %s120
      %p124 = scmp.eq.s32.totalorder %s21, 0
      %p125 = por %p123, %p124
      %p126 = scmp.ne.s32.totalorder %s118, %s120
      %p127 = scmp.eq.s32.totalorder %s26, 1
      %p128 = por %p126, %p127
      %p129 = scmp.ne.s32.totalorder %s120, %s121
      %p130 = scmp.eq.s32.totalorder %s26, 0
      %p131 = por %p129, %p130
      %p132 = scmp.ne.s32.totalorder %s120, %s121
      %p133 = scmp.eq.s32.totalorder %s27, 1
      %p134 = por %p132, %p133
      %p136 = scmp.ne.s32.totalorder %s121, %s135
      %p137 = scmp.eq.s32.totalorder %s27, 0
      %p138 = por %p136, %p137
      %s140 = sadd.s32 %s139, 1
      %p143 = scmp.eq.s32.totalorder %s21, 1
      %p144 = scmp.ne.s32.totalorder %s139, %s141
      %p145 = scmp.eq.s32.totalorder %s21, 0
      %p146 = por %p144, %p145
      %p147 = scmp.ne.s32.totalorder %s139, %s141
      %p148 = scmp.eq.s32.totalorder %s26, 1
      %p149 = por %p147, %p148
      %p150 = scmp.ne.s32.totalorder %s141, %s142
      %p151 = scmp.eq.s32.totalorder %s26, 0
      %p152 = por %p150, %p151
      %p153 = scmp.ne.s32.totalorder %s141, %s142
      %p154 = scmp.eq.s32.totalorder %s27, 1
      %p155 = por %p153, %p154
      %p157 = scmp.ne.s32.totalorder %s142, %s156
      %p158 = scmp.eq.s32.totalorder %s27, 0
      %p159 = por %p157, %p158
      %s161 = sadd.s32 %s160, 1
      %p164 = scmp.eq.s32.totalorder %s21, 1
      %p165 = scmp.ne.s32.totalorder %s160, %s162
      %p166 = scmp.eq.s32.totalorder %s21, 0
      %p167 = por %p165, %p166
      %p168 = scmp.ne.s32.totalorder %s160, %s162
      %p169 = scmp.eq.s32.totalorder %s26, 1
      %p170 = por %p168, %p169
      %p171 = scmp.ne.s32.totalorder %s162, %s163
      %p172 = scmp.eq.s32.totalorder %s26, 0
      %p173 = por %p171, %p172
      %p174 = scmp.ne.s32.totalorder %s162, %s163
      %p175 = scmp.eq.s32.totalorder %s27, 1
      %p176 = por %p174, %p175
      %p178 = scmp.ne.s32.totalorder %s163, %s177
      %p179 = scmp.eq.s32.totalorder %s27, 0
      %p180 = por %p178, %p179
      %s182 = sadd.s32 %s181, 1
      %p185 = scmp.eq.s32.totalorder %s21, 1
      %p186 = scmp.ne.s32.totalorder %s181, %s183
      %p187 = scmp.eq.s32.totalorder %s21, 0
      %p188 = por %p186, %p187
      %p189 = scmp.ne.s32.totalorder %s181, %s183
      %p190 = scmp.eq.s32.totalorder %s26, 1
      %p191 = por %p189, %p190
      %p192 = scmp.ne.s32.totalorder %s183, %s184
      %p193 = scmp.eq.s32.totalorder %s26, 0
      %p194 = por %p192, %p193
      %p195 = scmp.ne.s32.totalorder %s183, %s184
      %p196 = scmp.eq.s32.totalorder %s27, 1
      %p197 = por %p195, %p196
      %p199 = scmp.ne.s32.totalorder %s184, %s198
      %p200 = scmp.eq.s32.totalorder %s27, 0
      %p201 = por %p199, %p200
      %s203 = sadd.s32 %s202, 1
      %p206 = scmp.eq.s32.totalorder %s21, 1
      %p207 = scmp.ne.s32.totalorder %s202, %s204
      %p208 = scmp.eq.s32.totalorder %s21, 0
      %p209 = por %p207, %p208
      %p210 = scmp.ne.s32.totalorder %s202, %s204
      %p211 = scmp.eq.s32.totalorder %s26, 1
      %p212 = por %p210, %p211
      %p213 = scmp.ne.s32.totalorder %s204, %s205
      %p214 = scmp.eq.s32.totalorder %s26, 0
      %p215 = por %p213, %p214
      %p216 = scmp.ne.s32.totalorder %s204, %s205
      %p217 = scmp.eq.s32.totalorder %s27, 1
      %p218 = por %p216, %p217
      %p220 = scmp.ne.s32.totalorder %s205, %s219
      %p221 = scmp.eq.s32.totalorder %s27, 0
      %p222 = por %p220, %p221
      %s224 = sadd.s32 %s223, 1
      %p227 = scmp.eq.s32.totalorder %s21, 1
      %p228 = scmp.ne.s32.totalorder %s223, %s225
      %p229 = scmp.eq.s32.totalorder %s21, 0
      %p230 = por %p228, %p229
      %p231 = scmp.ne.s32.totalorder %s223, %s225
      %p232 = scmp.eq.s32.totalorder %s26, 1
      %p233 = por %p231, %p232
      %p234 = scmp.ne.s32.totalorder %s225, %s226
      %p235 = scmp.eq.s32.totalorder %s26, 0
      %p236 = por %p234, %p235
      %p237 = scmp.ne.s32.totalorder %s225, %s226
      %p238 = scmp.eq.s32.totalorder %s27, 1
      %p239 = por %p237, %p238
      %p241 = scmp.ne.s32.totalorder %s226, %s240
      %p242 = scmp.eq.s32.totalorder %s27, 0
      %p243 = por %p241, %p242
      %s245 = sadd.s32 %s244, 1
      %p248 = scmp.eq.s32.totalorder %s21, 1
      %p249 = scmp.ne.s32.totalorder %s244, %s246
      %p250 = scmp.eq.s32.totalorder %s21, 0
      %p251 = por %p249, %p250
      %p252 = scmp.ne.s32.totalorder %s244, %s246
      %p253 = scmp.eq.s32.totalorder %s26, 1
      %p254 = por %p252, %p253
      %p255 = scmp.ne.s32.totalorder %s246, %s247
      %p256 = scmp.eq.s32.totalorder %s26, 0
      %p257 = por %p255, %p256
      %p258 = scmp.ne.s32.totalorder %s246, %s247
      %p259 = scmp.eq.s32.totalorder %s27, 1
      %p260 = por %p258, %p259
      %p262 = scmp.ne.s32.totalorder %s247, %s261
      %p263 = scmp.eq.s32.totalorder %s27, 0
      %p264 = por %p262, %p263
      %s266 = sadd.s32 %s265, 1
      %p269 = scmp.eq.s32.totalorder %s21, 1
      %p270 = scmp.ne.s32.totalorder %s265, %s267
      %p271 = scmp.eq.s32.totalorder %s21, 0
      %p272 = por %p270, %p271
      %p273 = scmp.ne.s32.totalorder %s265, %s267
      %p274 = scmp.eq.s32.totalorder %s26, 1
      %p275 = por %p273, %p274
      %p276 = scmp.ne.s32.totalorder %s267, %s268
      %p277 = scmp.eq.s32.totalorder %s26, 0
      %p278 = por %p276, %p277
      %p279 = scmp.ne.s32.totalorder %s267, %s268
      %p280 = scmp.eq.s32.totalorder %s27, 1
      %p281 = por %p279, %p280
      %p283 = scmp.ne.s32.totalorder %s268, %s282
      %p284 = scmp.eq.s32.totalorder %s27, 0
      %p285 = por %p283, %p284
      %s286 = ssub.s32 %s21, %s28
      %p287 = scmp.eq.s32.totalorder %s286, 0
      %s289 = sadd.s32 %s288, 1
      %s290 = scalar_select %p287, %s288, %s289
      %p293 = pneg %p287
      %p294 = scmp.eq.s32.totalorder %s21, 1
      %p295 = por %p293, %p294
      %p296 = scmp.ne.s32.totalorder %s288, %s291
      %p297 = scmp.eq.s32.totalorder %s21, 0
      %p298 = por %p296, %p297
      %p299 = scmp.ne.s32.totalorder %s288, %s291
      %p300 = scmp.eq.s32.totalorder %s26, 1
      %p301 = por %p299, %p300
      %p302 = scmp.ne.s32.totalorder %s291, %s292
      %p303 = scmp.eq.s32.totalorder %s26, 0
      %p304 = por %p302, %p303
      %p305 = scmp.ne.s32.totalorder %s291, %s292
      %p306 = scmp.eq.s32.totalorder %s27, 1
      %p307 = por %p305, %p306
      %p309 = scmp.ne.s32.totalorder %s292, %s308
      %p310 = scmp.eq.s32.totalorder %s27, 0
      %p311 = por %p309, %p310
      %p312 = scmp.le.s32.totalorder 1, %s21
      %p313 = scmp.lt.s32.totalorder %s21, 3
      %p314 = pnand %p312, %p313
      %p315 = pneg %p314
      // Predicated region
      $region9: #{continuous_transformer_forward.1} parent=5 // pred_check
        _
      $region10: #{continuous_transformer_forward.1} parent=5 // pred_check_branch
        %317 = sbr.rel (%p314) target = $region12
      $region11: #{continuous_transformer_forward.1} parent=5 // pred_region
        %s318 = ssub.s32 %s21, 1
        // Predicated region
        $region13: #{continuous_transformer_forward.1} parent=11 // pred_check
          %p319 = pneg %p68
        $region14: #{continuous_transformer_forward.1} parent=11 // pred_check_branch
          %321 = sbr.rel (%p319) target = $region16
        $region15: #{continuous_transformer_forward.1} parent=11 // pred_region
          _
        $region16: #{continuous_transformer_forward.1} parent=11 // pred_fallthru
          _
        // Predicated region
        $region17: #{continuous_transformer_forward.1} parent=11 // pred_check
          %p322 = pneg %p89
        $region18: #{continuous_transformer_forward.1} parent=11 // pred_check_branch
          %324 = sbr.rel (%p322) target = $region20
        $region19: #{continuous_transformer_forward.1} parent=11 // pred_region
          _
        $region20: #{continuous_transformer_forward.1} parent=11 // pred_fallthru
          _
        // Predicated region
        $region21: #{continuous_transformer_forward.1} parent=11 // pred_check
          %p325 = pneg %p110
        $region22: #{continuous_transformer_forward.1} parent=11 // pred_check_branch
          %327 = sbr.rel (%p325) target = $region24
        $region23: #{continuous_transformer_forward.1} parent=11 // pred_region
          _
        $region24: #{continuous_transformer_forward.1} parent=11 // pred_fallthru
          _
        // Predicated region
        $region25: #{continuous_transformer_forward.1} parent=11 // pred_check
          %p328 = pneg %p131
        $region26: #{continuous_transformer_forward.1} parent=11 // pred_check_branch
          %330 = sbr.rel (%p328) target = $region28
        $region27: #{continuous_transformer_forward.1} parent=11 // pred_region
          _
        $region28: #{continuous_transformer_forward.1} parent=11 // pred_fallthru
          _
        // Predicated region
        $region29: #{continuous_transformer_forward.1} parent=11 // pred_check
          %p331 = pneg %p152
        $region30: #{continuous_transformer_forward.1} parent=11 // pred_check_branch
          %333 = sbr.rel (%p331) target = $region32
        $region31: #{continuous_transformer_forward.1} parent=11 // pred_region
          _
        $region32: #{continuous_transformer_forward.1} parent=11 // pred_fallthru
          _
        // Predicated region
        $region33: #{continuous_transformer_forward.1} parent=11 // pred_check
          %p334 = pneg %p173
        $region34: #{continuous_transformer_forward.1} parent=11 // pred_check_branch
          %336 = sbr.rel (%p334) target = $region36
        $region35: #{continuous_transformer_forward.1} parent=11 // pred_region
          _
        $region36: #{continuous_transformer_forward.1} parent=11 // pred_fallthru
          _
        // Predicated region
        $region37: #{continuous_transformer_forward.1} parent=11 // pred_check
          %p337 = pneg %p194
        $region38: #{continuous_transformer_forward.1} parent=11 // pred_check_branch
          %339 = sbr.rel (%p337) target = $region40
        $region39: #{continuous_transformer_forward.1} parent=11 // pred_region
          _
        $region40: #{continuous_transformer_forward.1} parent=11 // pred_fallthru
          _
        // Predicated region
        $region41: #{continuous_transformer_forward.1} parent=11 // pred_check
          %p340 = pneg %p215
        $region42: #{continuous_transformer_forward.1} parent=11 // pred_check_branch
          %342 = sbr.rel (%p340) target = $region44
        $region43: #{continuous_transformer_forward.1} parent=11 // pred_region
          _
        $region44: #{continuous_transformer_forward.1} parent=11 // pred_fallthru
          _
        // Predicated region
        $region45: #{continuous_transformer_forward.1} parent=11 // pred_check
          %p343 = pneg %p236
        $region46: #{continuous_transformer_forward.1} parent=11 // pred_check_branch
          %345 = sbr.rel (%p343) target = $region48
        $region47: #{continuous_transformer_forward.1} parent=11 // pred_region
          _
        $region48: #{continuous_transformer_forward.1} parent=11 // pred_fallthru
          _
        // Predicated region
        $region49: #{continuous_transformer_forward.1} parent=11 // pred_check
          %p346 = pneg %p257
        $region50: #{continuous_transformer_forward.1} parent=11 // pred_check_branch
          %348 = sbr.rel (%p346) target = $region52
        $region51: #{continuous_transformer_forward.1} parent=11 // pred_region
          _
        $region52: #{continuous_transformer_forward.1} parent=11 // pred_fallthru
          _
        // Predicated region
        $region53: #{continuous_transformer_forward.1} parent=11 // pred_check
          %p349 = pneg %p278
        $region54: #{continuous_transformer_forward.1} parent=11 // pred_check_branch
          %351 = sbr.rel (%p349) target = $region56
        $region55: #{continuous_transformer_forward.1} parent=11 // pred_region
          _
        $region56: #{continuous_transformer_forward.1} parent=11 // pred_fallthru
          _
      $region12: #{continuous_transformer_forward.1} parent=5 // pred_fallthru
        _
      %p352 = scmp.lt.s32.totalorder %s21, 2
      // Predicated region
      $region57: #{continuous_transformer_forward.1} parent=5 // pred_check
        %p353 = pneg %p352
      $region58: #{continuous_transformer_forward.1} parent=5 // pred_check_branch
        %355 = sbr.rel (%p353) target = $region60
      $region59: #{continuous_transformer_forward.1} parent=5 // pred_region
        // Predicated region
        $region61: #{continuous_transformer_forward.1} parent=59 // pred_check
          %p356 = pneg %p41
        $region62: #{continuous_transformer_forward.1} parent=59 // pred_check_branch
          %358 = sbr.rel (%p356) target = $region64
        $region63: #{continuous_transformer_forward.1} parent=59 // pred_region
          %p359 = scmp.lt.s32.totalorder %s21, 1
          %s360 = scalar_select %p359, %s21, 1
          %s361 = smul.addr %s360, 8
          %s362 = scalar_lea.vmem %s0, %s361
        $region64: #{continuous_transformer_forward.1} parent=59 // pred_fallthru
          _
      $region60: #{continuous_transformer_forward.1} parent=5 // pred_fallthru
        _
      %p363 = scmp.le.s32.totalorder 1, %s21
      %p364 = scmp.lt.s32.totalorder %s21, 3
      %p365 = pnand %p363, %p364
      %p366 = pneg %p365
      // Predicated region
      $region65: #{continuous_transformer_forward.1} parent=5 // pred_check
        _
      $region66: #{continuous_transformer_forward.1} parent=5 // pred_check_branch
        %368 = sbr.rel (%p365) target = $region68
      $region67: #{continuous_transformer_forward.1} parent=5 // pred_region
        %s369 = ssub.s32 %s21, 1
        %p370 = scmp.lt.s32.totalorder %s26, 1
        %s371 = scalar_select %p370, %s26, 1
        %s372 = smul.addr %s371, 8
        %s373 = scalar_lea.vmem %s0, %s372
        %p374 = pneg %p47
        %p375 = pneg %p44
        %p376 = pneg %p68
        %p377 = pneg %p65
        %p378 = pneg %p89
        %p379 = pneg %p86
        %p380 = pneg %p110
        %p381 = pneg %p107
        %p382 = pneg %p131
        %p383 = pneg %p128
        %p384 = pneg %p152
        %p385 = pneg %p149
        %p386 = pneg %p173
        %p387 = pneg %p170
        %p388 = pneg %p194
        %p389 = pneg %p191
        %p390 = pneg %p215
        %p391 = pneg %p212
        %p392 = pneg %p236
        %p393 = pneg %p233
        %p394 = pneg %p257
        %p395 = pneg %p254
        %p396 = pneg %p278
        %p397 = pneg %p275
        %p398 = pneg %p304
        %p399 = pneg %p301
        %s400 = sand.u32 %s291, 1
        %s401 = scalar_lea.sflag [#allocation3], %s400
        %s402 = sand.u32 %s291, 1
        %s403 = smul.addr %s402, 8
        %s404 = scalar_lea.vmem [#allocation2], %s403
        %p405 = scmp.lt.s32.totalorder %s26, 1
        %s406 = scalar_select %p405, %s26, 1
        %s407 = smul.addr %s406, 8
        %s408 = scalar_lea.vmem %s0, %s407
        %v410 = vld [vmem:[%s1] sm:$0xff]
        %v411 = vld [vmem:[%s2] sm:$0xff]
        %v412 = vld [vmem:[%s408] sm:$0xff]
        %v413 = vpack.c.bf16 %v412, %v412
        %v414 = vld [vmem:[%s3] sm:$0xf]
        %v415 = vld [vmem:[%s3 + $0x4] sm:$0xf]
        %v416 = vld [vmem:[%s3 + $0x8] sm:$0xf]
        %v417 = vld [vmem:[%s3 + $0xc] sm:$0xf]
        %v422 = vunpack.c.l.b16 %v414
        %v423 = vunpack.c.l.b16 %v415
        %v424 = vunpack.c.l.b16 %v416
        %v425 = vunpack.c.l.b16 %v417
        %v426 = vpack.c.b16 %v423, %v422
        %v427 = vpack.c.b16 %v425, %v424
        %vm430 = vcmask 261120
        %v432 = vsel %vm430, %v413, 0
        %434 = vmatprep.subr.bf16.mxu0 0
        %435 = vmatpush1.bf16.msra.mxu0 %v426
        %436 = vmatprep.subr.bf16.mxu0 0
        %437 = vmatpush1.bf16.msra.mxu0 %v427
        %438 = vmatprep.subr.bf16.mxu0 0
        %439 = vmatpush1.bf16.msra.mxu0 0
        %440 = vmatprep.subr.bf16.mxu0 0
        %441 = vmatpush1.bf16.msra.mxu0 0
        %442 = vmatprep.subr.bf16.mxu0 0
        %443 = vmatpush1.bf16.msra.mxu0 0
        %444 = vmatprep.subr.bf16.mxu0 0
        %445 = vmatpush1.bf16.msra.mxu0 0
        %446 = vmatprep.subr.bf16.mxu0 0
        %447 = vmatpush1.bf16.msra.mxu0 0
        %448 = vmatprep.subr.bf16.mxu0 0
        %449 = vmatpush1.bf16.msra.mxu0 0
        %450 = vmatprep.subr.bf16.mxu0 0
        %451 = vmatpush1.bf16.msra.mxu0 0
        %452 = vmatprep.subr.bf16.mxu0 0
        %453 = vmatpush1.bf16.msra.mxu0 0
        %454 = vmatprep.subr.bf16.mxu0 0
        %455 = vmatpush1.bf16.msra.mxu0 0
        %456 = vmatprep.subr.bf16.mxu0 0
        %457 = vmatpush1.bf16.msra.mxu0 0
        %458 = vmatprep.subr.bf16.mxu0 0
        %459 = vmatpush1.bf16.msra.mxu0 0
        %460 = vmatprep.subr.bf16.mxu0 0
        %461 = vmatpush1.bf16.msra.mxu0 0
        %462 = vmatprep.subr.bf16.mxu0 0
        %463 = vmatpush1.bf16.msra.mxu0 0
        %464 = vmatprep.subr.bf16.mxu0 0
        %465 = vmatpush1.bf16.msra.mxu0 0
        %466 = vmatprep.mubr.bf16.mxu0 0
        %467 = vmatmul.mubr.bf16.gmra.mrb[0].mxu0 %v432
        %v468 = vpop.f32.mrb[0].mxu0
        %v469 = vadd.f32 0.0, %v468
        %v470 = vpop.f32.mrb[0].mxu0
        %v471 = vpop.f32.mrb[0].mxu0
        %v472 = vpop.f32.mrb[0].mxu0
        %473 = vdwg.mxu0
        %v474 = vld [vmem:[%s5] sm:$0x1]
        %vm475 = vcmask 523264
        %v476 = vsel %vm475, %v469, 0.0
        %477 = vadd.xlane.f32.xlu0 %v476
        %v478 = vpop.xlane.xlu0 %477
        %v479 = vrcp.pop 64.0
        %v480 = vmul.f32 %v478, %v479
        %v481 = vsub.f32 %v469, %v480
        %v482 = vmul.f32 %v481, %v481
        %v483 = vsel %vm475, %v482, 0.0
        %484 = vadd.xlane.f32.xlu0 %v483
        %v485 = vpop.xlane.xlu0 %484
        %v486 = vmul.f32 %v485, %v479
        %v487 = vadd.f32 %v486, 1e-05
        %v488 = vrsqrt.pop %v487
        %v489 = vmul.f32 %v481, %v488
        %v491 = vlaneseq
        %v492 = vshrl.u32 %v491, 7
        %v493 = vsub.s32 0, %v492
        %v494 = vrot.slane %v474, %v493
        %v496 = vmul.f32 %v489, %v494
        %v497 = vpack.c.bf16 %v496, %v496
        %v498 = vld [vmem:[%s6] sm:$0xff]
        %v499 = vld [vmem:[%s6 + $0x8] sm:$0xf]
        %v500 = vld [vmem:[%s6 + $0xc] sm:$0xff]
        %v501 = vld [vmem:[%s6 + $0x14] sm:$0xf]
        %v502 = vld [vmem:[%s6 + $0x18] sm:$0xff]
        %v503 = vld [vmem:[%s6 + $0x20] sm:$0xf]
        %v504 = vld [vmem:[%s6 + $0x24] sm:$0xff]
        %v505 = vld [vmem:[%s6 + $0x2c] sm:$0xf]
        %v506 = vld [vmem:[%s6 + $0x30] sm:$0xff]
        %v507 = vld [vmem:[%s6 + $0x38] sm:$0xf]
        %v508 = vld [vmem:[%s6 + $0x3c] sm:$0xff]
        %v509 = vld [vmem:[%s6 + $0x44] sm:$0xf]
        %v510 = vld [vmem:[%s6 + $0x48] sm:$0xff]
        %v511 = vld [vmem:[%s6 + $0x50] sm:$0xf]
        %v512 = vld [vmem:[%s6 + $0x54] sm:$0xff]
        %v513 = vld [vmem:[%s6 + $0x5c] sm:$0xf]
        %v530 = vunpack.c.l.b16 %v498
        %v531 = vunpack.c.h.b16 %v498
        %v532 = vunpack.c.l.b16 %v499
        %v533 = vunpack.c.l.b16 %v500
        %v534 = vunpack.c.h.b16 %v500
        %v535 = vunpack.c.l.b16 %v501
        %v536 = vunpack.c.l.b16 %v502
        %v537 = vunpack.c.h.b16 %v502
        %v538 = vunpack.c.l.b16 %v503
        %v539 = vunpack.c.l.b16 %v504
        %v540 = vunpack.c.h.b16 %v504
        %v541 = vunpack.c.l.b16 %v505
        %v542 = vunpack.c.l.b16 %v506
        %v543 = vunpack.c.h.b16 %v506
        %v544 = vunpack.c.l.b16 %v507
        %v545 = vunpack.c.l.b16 %v508
        %v546 = vunpack.c.h.b16 %v508
        %v547 = vunpack.c.l.b16 %v509
        %v548 = vunpack.c.l.b16 %v510
        %v549 = vunpack.c.h.b16 %v510
        %v550 = vunpack.c.l.b16 %v511
        %v551 = vunpack.c.l.b16 %v512
        %v552 = vunpack.c.h.b16 %v512
        %v553 = vunpack.c.l.b16 %v513
        %v554 = vpack.c.b16 %v533, %v530
        %v555 = vpack.c.b16 %v534, %v531
        %v556 = vpack.c.b16 %v535, %v532
        %v557 = vpack.c.b16 %v539, %v536
        %v558 = vpack.c.b16 %v540, %v537
        %v559 = vpack.c.b16 %v541, %v538
        %v560 = vpack.c.b16 %v545, %v542
        %v561 = vpack.c.b16 %v546, %v543
        %v562 = vpack.c.b16 %v547, %v544
        %v563 = vpack.c.b16 %v551, %v548
        %v564 = vpack.c.b16 %v552, %v549
        %v565 = vpack.c.b16 %v553, %v550
        %v579 = vsel %vm475, %v497, 0
        %581 = vmatprep.subr.bf16.mxu0 %v555
        %582 = vmatpush1.bf16.msra.mxu0 %v554
        %583 = vmatprep.subr.bf16.mxu0 %v558
        %584 = vmatpush1.bf16.msra.mxu0 %v557
        %585 = vmatprep.subr.bf16.mxu0 %v561
        %586 = vmatpush1.bf16.msra.mxu0 %v560
        %587 = vmatprep.subr.bf16.mxu0 %v564
        %588 = vmatpush1.bf16.msra.mxu0 %v563
        %589 = vmatprep.subr.bf16.mxu0 0
        %590 = vmatpush1.bf16.msra.mxu0 0
        %591 = vmatprep.subr.bf16.mxu0 0
        %592 = vmatpush1.bf16.msra.mxu0 0
        %593 = vmatprep.subr.bf16.mxu0 0
        %594 = vmatpush1.bf16.msra.mxu0 0
        %595 = vmatprep.subr.bf16.mxu0 0
        %596 = vmatpush1.bf16.msra.mxu0 0
        %597 = vmatprep.subr.bf16.mxu0 0
        %598 = vmatpush1.bf16.msra.mxu0 0
        %599 = vmatprep.subr.bf16.mxu0 0
        %600 = vmatpush1.bf16.msra.mxu0 0
        %601 = vmatprep.subr.bf16.mxu0 0
        %602 = vmatpush1.bf16.msra.mxu0 0
        %603 = vmatprep.subr.bf16.mxu0 0
        %604 = vmatpush1.bf16.msra.mxu0 0
        %605 = vmatprep.subr.bf16.mxu0 0
        %606 = vmatpush1.bf16.msra.mxu0 0
        %607 = vmatprep.subr.bf16.mxu0 0
        %608 = vmatpush1.bf16.msra.mxu0 0
        %609 = vmatprep.subr.bf16.mxu0 0
        %610 = vmatpush1.bf16.msra.mxu0 0
        %611 = vmatprep.subr.bf16.mxu0 0
        %612 = vmatpush1.bf16.msra.mxu0 0
        %613 = vmatprep.mubr.bf16.mxu0 0
        %614 = vmatmul.mubr.bf16.gmra.mrb[0].mxu0 %v579
        %v615 = vpop.f32.mrb[0].mxu0
        %v616 = vadd.f32 0.0, %v615
        %v617 = vpop.f32.mrb[0].mxu0
        %v618 = vadd.f32 0.0, %v617
        %v619 = vpop.f32.mrb[0].mxu0
        %v620 = vpop.f32.mrb[0].mxu0
        %621 = vdwg.mxu0
        %622 = vmatprep.subr.bf16.mxu0 0
        %623 = vmatpush1.bf16.msra.mxu0 %v556
        %624 = vmatprep.subr.bf16.mxu0 0
        %625 = vmatpush1.bf16.msra.mxu0 %v559
        %626 = vmatprep.subr.bf16.mxu0 0
        %627 = vmatpush1.bf16.msra.mxu0 %v562
        %628 = vmatprep.subr.bf16.mxu0 0
        %629 = vmatpush1.bf16.msra.mxu0 %v565
        %630 = vmatprep.subr.bf16.mxu0 0
        %631 = vmatpush1.bf16.msra.mxu0 0
        %632 = vmatprep.subr.bf16.mxu0 0
        %633 = vmatpush1.bf16.msra.mxu0 0
        %634 = vmatprep.subr.bf16.mxu0 0
        %635 = vmatpush1.bf16.msra.mxu0 0
        %636 = vmatprep.subr.bf16.mxu0 0
        %637 = vmatpush1.bf16.msra.mxu0 0
        %638 = vmatprep.subr.bf16.mxu0 0
        %639 = vmatpush1.bf16.msra.mxu0 0
        %640 = vmatprep.subr.bf16.mxu0 0
        %641 = vmatpush1.bf16.msra.mxu0 0
        %642 = vmatprep.subr.bf16.mxu0 0
        %643 = vmatpush1.bf16.msra.mxu0 0
        %644 = vmatprep.subr.bf16.mxu0 0
        %645 = vmatpush1.bf16.msra.mxu0 0
        %646 = vmatprep.subr.bf16.mxu0 0
        %647 = vmatpush1.bf16.msra.mxu0 0
        %648 = vmatprep.subr.bf16.mxu0 0
        %649 = vmatpush1.bf16.msra.mxu0 0
        %650 = vmatprep.subr.bf16.mxu0 0
        %651 = vmatpush1.bf16.msra.mxu0 0
        %652 = vmatprep.subr.bf16.mxu0 0
        %653 = vmatpush1.bf16.msra.mxu0 0
        %654 = vmatprep.mubr.bf16.mxu0 0
        %655 = vmatmul.mubr.bf16.gmra.mrb[0].mxu0 %v579
        %v656 = vpop.f32.mrb[0].mxu0
        %v657 = vadd.f32 0.0, %v656
        %v658 = vpop.f32.mrb[0].mxu0
        %v659 = vpop.f32.mrb[0].mxu0
        %v660 = vpop.f32.mrb[0].mxu0
        %661 = vdwg.mxu0
        %v662 = vmul.f32 %v616, %v410
        %664 = vrot.lane.b32.xlu0 %v411, 64
        %v665 = vpop.permute.xlu0 %664
        %v667 = vmul.f32 %v616, %v665
        %669 = vrot.lane.b32.xlu0 %v667, 64
        %v670 = vpop.permute.xlu0 %669
        %v672 = vadd.f32 %v662, %v670
        %v673 = vmul.f32 %v618, %v410
        %v674 = vmul.f32 %v618, %v665
        %676 = vrot.lane.b32.xlu0 %v674, 64
        %v677 = vpop.permute.xlu0 %676
        %v679 = vadd.f32 %v673, %v677
        %v680 = vpack.c.bf16 %v672, %v672
        %v681 = vpack.c.bf16 %v679, %v679
        %v682 = vpack.c.bf16 %v657, %v657
        %v684 = vsel %vm475, %v680, 0
        %v687 = vsel %vm475, %v681, 0
        %689 = vmatprep.subr.bf16.mxu0 0
        %690 = vmatpush1.bf16.xpose.msra.mxu0 %v687
        %691 = vmatprep.subr.bf16.mxu0 0
        %692 = vmatpush1.bf16.xpose.msra.mxu0 0
        %693 = vmatprep.subr.bf16.mxu0 0
        %694 = vmatpush1.bf16.xpose.msra.mxu0 0
        %695 = vmatprep.subr.bf16.mxu0 0
        %696 = vmatpush1.bf16.xpose.msra.mxu0 0
        %697 = vmatprep.subr.bf16.mxu0 0
        %698 = vmatpush1.bf16.xpose.msra.mxu0 0
        %699 = vmatprep.subr.bf16.mxu0 0
        %700 = vmatpush1.bf16.xpose.msra.mxu0 0
        %701 = vmatprep.subr.bf16.mxu0 0
        %702 = vmatpush1.bf16.xpose.msra.mxu0 0
        %703 = vmatprep.subr.bf16.mxu0 0
        %704 = vmatpush1.bf16.xpose.msra.mxu0 0
        %705 = vmatprep.subr.bf16.mxu0 0
        %706 = vmatpush1.bf16.xpose.msra.mxu0 0
        %707 = vmatprep.subr.bf16.mxu0 0
        %708 = vmatpush1.bf16.xpose.msra.mxu0 0
        %709 = vmatprep.subr.bf16.mxu0 0
        %710 = vmatpush1.bf16.xpose.msra.mxu0 0
        %711 = vmatprep.subr.bf16.mxu0 0
        %712 = vmatpush1.bf16.xpose.msra.mxu0 0
        %713 = vmatprep.subr.bf16.mxu0 0
        %714 = vmatpush1.bf16.xpose.msra.mxu0 0
        %715 = vmatprep.subr.bf16.mxu0 0
        %716 = vmatpush1.bf16.xpose.msra.mxu0 0
        %717 = vmatprep.subr.bf16.mxu0 0
        %718 = vmatpush1.bf16.xpose.msra.mxu0 0
        %719 = vmatprep.subr.bf16.mxu0 0
        %720 = vmatpush1.bf16.xpose.msra.mxu0 0
        %721 = vmatprep.mubr.bf16.mxu0 0
        %722 = vmatmul.mubr.bf16.gmra.mrb[0].mxu0 %v684
        %v723 = vpop.f32.mrb[0].mxu0
        %v724 = vadd.f32 0.0, %v723
        %v725 = vpop.f32.mrb[0].mxu0
        %v726 = vpop.f32.mrb[0].mxu0
        %v727 = vpop.f32.mrb[0].mxu0
        %728 = vdwg.mxu0
        %vm729 = vcmask 64512
        %v730 = vsel %vm729, %v724, -inf
        %731 = vmax.xlane.f32.xlu0 %v730
        %v732 = vpop.xlane.xlu0 %731
        %v733 = vsub.f32 %v724, %v732
        %v734 = vmul.f32 %v733, 1.442695
        %v735 = vpow.pop %v734
        %v736 = vsel %vm729, %v735, 0.0
        %737 = vadd.xlane.f32.xlu0 %v736
        %v738 = vpop.xlane.xlu0 %737
        %v739 = vrcp.pop %v738
        %v740 = vmul.f32 %v735, %v739
        %v741 = vpack.c.bf16 %v740, %v740
        %v743 = vsel %vm729, %v741, 0
        %vm745 = vcmask 1043456
        %v747 = vsel %vm745, %v682, 0
        %749 = vmatprep.subr.bf16.mxu0 0
        %750 = vmatpush1.bf16.msra.mxu0 %v747
        %751 = vmatprep.subr.bf16.mxu0 0
        %752 = vmatpush1.bf16.msra.mxu0 0
        %753 = vmatprep.subr.bf16.mxu0 0
        %754 = vmatpush1.bf16.msra.mxu0 0
        %755 = vmatprep.subr.bf16.mxu0 0
        %756 = vmatpush1.bf16.msra.mxu0 0
        %757 = vmatprep.subr.bf16.mxu0 0
        %758 = vmatpush1.bf16.msra.mxu0 0
        %759 = vmatprep.subr.bf16.mxu0 0
        %760 = vmatpush1.bf16.msra.mxu0 0
        %761 = vmatprep.subr.bf16.mxu0 0
        %762 = vmatpush1.bf16.msra.mxu0 0
        %763 = vmatprep.subr.bf16.mxu0 0
        %764 = vmatpush1.bf16.msra.mxu0 0
        %765 = vmatprep.subr.bf16.mxu0 0
        %766 = vmatpush1.bf16.msra.mxu0 0
        %767 = vmatprep.subr.bf16.mxu0 0
        %768 = vmatpush1.bf16.msra.mxu0 0
        %769 = vmatprep.subr.bf16.mxu0 0
        %770 = vmatpush1.bf16.msra.mxu0 0
        %771 = vmatprep.subr.bf16.mxu0 0
        %772 = vmatpush1.bf16.msra.mxu0 0
        %773 = vmatprep.subr.bf16.mxu0 0
        %774 = vmatpush1.bf16.msra.mxu0 0
        %775 = vmatprep.subr.bf16.mxu0 0
        %776 = vmatpush1.bf16.msra.mxu0 0
        %777 = vmatprep.subr.bf16.mxu0 0
        %778 = vmatpush1.bf16.msra.mxu0 0
        %779 = vmatprep.subr.bf16.mxu0 0
        %780 = vmatpush1.bf16.msra.mxu0 0
        %781 = vmatprep.mubr.bf16.mxu0 0
        %782 = vmatmul.mubr.bf16.gmra.mrb[0].mxu0 %v743
        %v783 = vpop.f32.mrb[0].mxu0
        %v784 = vadd.f32 0.0, %v783
        %v785 = vpop.f32.mrb[0].mxu0
        %v786 = vpop.f32.mrb[0].mxu0
        %v787 = vpop.f32.mrb[0].mxu0
        %788 = vdwg.mxu0
        %v789 = vpack.c.bf16 %v784, %v784
        %v790 = vld [vmem:[%s7] sm:$0xf]
        %v791 = vld [vmem:[%s7 + $0x4] sm:$0xf]
        %v792 = vld [vmem:[%s7 + $0x8] sm:$0xf]
        %v793 = vld [vmem:[%s7 + $0xc] sm:$0xf]
        %v794 = vld [vmem:[%s7 + $0x10] sm:$0xf]
        %v795 = vld [vmem:[%s7 + $0x14] sm:$0xf]
        %v796 = vld [vmem:[%s7 + $0x18] sm:$0xf]
        %v797 = vld [vmem:[%s7 + $0x1c] sm:$0xf]
        %v806 = vunpack.c.l.b16 %v790
        %v807 = vunpack.c.l.b16 %v791
        %v808 = vunpack.c.l.b16 %v792
        %v809 = vunpack.c.l.b16 %v793
        %v810 = vunpack.c.l.b16 %v794
        %v811 = vunpack.c.l.b16 %v795
        %v812 = vunpack.c.l.b16 %v796
        %v813 = vunpack.c.l.b16 %v797
        %v814 = vpack.c.b16 %v807, %v806
        %v815 = vpack.c.b16 %v809, %v808
        %v816 = vpack.c.b16 %v811, %v810
        %v817 = vpack.c.b16 %v813, %v812
        %v823 = vsel %vm475, %v789, 0
        %825 = vmatprep.subr.bf16.mxu0 0
        %826 = vmatpush1.bf16.msra.mxu0 %v814
        %827 = vmatprep.subr.bf16.mxu0 0
        %828 = vmatpush1.bf16.msra.mxu0 %v815
        %829 = vmatprep.subr.bf16.mxu0 0
        %830 = vmatpush1.bf16.msra.mxu0 %v816
        %831 = vmatprep.subr.bf16.mxu0 0
        %832 = vmatpush1.bf16.msra.mxu0 %v817
        %833 = vmatprep.subr.bf16.mxu0 0
        %834 = vmatpush1.bf16.msra.mxu0 0
        %835 = vmatprep.subr.bf16.mxu0 0
        %836 = vmatpush1.bf16.msra.mxu0 0
        %837 = vmatprep.subr.bf16.mxu0 0
        %838 = vmatpush1.bf16.msra.mxu0 0
        %839 = vmatprep.subr.bf16.mxu0 0
        %840 = vmatpush1.bf16.msra.mxu0 0
        %841 = vmatprep.subr.bf16.mxu0 0
        %842 = vmatpush1.bf16.msra.mxu0 0
        %843 = vmatprep.subr.bf16.mxu0 0
        %844 = vmatpush1.bf16.msra.mxu0 0
        %845 = vmatprep.subr.bf16.mxu0 0
        %846 = vmatpush1.bf16.msra.mxu0 0
        %847 = vmatprep.subr.bf16.mxu0 0
        %848 = vmatpush1.bf16.msra.mxu0 0
        %849 = vmatprep.subr.bf16.mxu0 0
        %850 = vmatpush1.bf16.msra.mxu0 0
        %851 = vmatprep.subr.bf16.mxu0 0
        %852 = vmatpush1.bf16.msra.mxu0 0
        %853 = vmatprep.subr.bf16.mxu0 0
        %854 = vmatpush1.bf16.msra.mxu0 0
        %855 = vmatprep.subr.bf16.mxu0 0
        %856 = vmatpush1.bf16.msra.mxu0 0
        %857 = vmatprep.mubr.bf16.mxu0 0
        %858 = vmatmul.mubr.bf16.gmra.mrb[0].mxu0 %v823
        %v859 = vpop.f32.mrb[0].mxu0
        %v860 = vadd.f32 0.0, %v859
        %v861 = vpop.f32.mrb[0].mxu0
        %v862 = vpop.f32.mrb[0].mxu0
        %v863 = vpop.f32.mrb[0].mxu0
        %864 = vdwg.mxu0
        %v865 = vadd.f32 %v469, %v860
        %s866 = scalar_lea.vmem %s5, 1
        %v867 = vld [vmem:[%s866] sm:$0x1]
        %v868 = vsel %vm475, %v865, 0.0
        %869 = vadd.xlane.f32.xlu0 %v868
        %v870 = vpop.xlane.xlu0 %869
        %v871 = vmul.f32 %v870, %v479
        %v872 = vsub.f32 %v865, %v871
        %v873 = vmul.f32 %v872, %v872
        %v874 = vsel %vm475, %v873, 0.0
        %875 = vadd.xlane.f32.xlu0 %v874
        %v876 = vpop.xlane.xlu0 %875
        %v877 = vmul.f32 %v876, %v479
        %v878 = vadd.f32 %v877, 1e-05
        %v879 = vrsqrt.pop %v878
        %v880 = vmul.f32 %v872, %v879
        %v882 = vlaneseq
        %v883 = vshrl.u32 %v882, 7
        %v884 = vsub.s32 0, %v883
        %v885 = vrot.slane %v867, %v884
        %v887 = vmul.f32 %v880, %v885
        %v888 = vpack.c.bf16 %v887, %v887
        %v889 = vld [vmem:[%s8] sm:$0xff]
        %v890 = vld [vmem:[%s8 + $0x8] sm:$0xff]
        %v891 = vld [vmem:[%s8 + $0x10] sm:$0xff]
        %v892 = vld [vmem:[%s8 + $0x18] sm:$0xff]
        %v893 = vld [vmem:[%s8 + $0x20] sm:$0xff]
        %v894 = vld [vmem:[%s8 + $0x28] sm:$0xff]
        %v895 = vld [vmem:[%s8 + $0x30] sm:$0xff]
        %v896 = vld [vmem:[%s8 + $0x38] sm:$0xff]
        %v897 = vld [vmem:[%s8 + $0x40] sm:$0xff]
        %v898 = vld [vmem:[%s8 + $0x48] sm:$0xff]
        %v899 = vld [vmem:[%s8 + $0x50] sm:$0xff]
        %v900 = vld [vmem:[%s8 + $0x58] sm:$0xff]
        %v901 = vld [vmem:[%s8 + $0x60] sm:$0xff]
        %v902 = vld [vmem:[%s8 + $0x68] sm:$0xff]
        %v903 = vld [vmem:[%s8 + $0x70] sm:$0xff]
        %v904 = vld [vmem:[%s8 + $0x78] sm:$0xff]
        %v905 = vld [vmem:[%s9] sm:$0xf]
        %v907 = vlaneseq
        %v908 = vshrl.u32 %v907, 7
        %v909 = vsub.s32 0, %v908
        %v910 = vrot.slane %v905, %v909
        %v911 = vlaneseq
        %v912 = vshrl.u32 %v911, 7
        %v913 = vsub.s32 1, %v912
        %v914 = vrot.slane %v905, %v913
        %v915 = vlaneseq
        %v916 = vshrl.u32 %v915, 7
        %v917 = vsub.s32 2, %v916
        %v918 = vrot.slane %v905, %v917
        %v919 = vlaneseq
        %v920 = vshrl.u32 %v919, 7
        %v921 = vsub.s32 3, %v920
        %v922 = vrot.slane %v905, %v921
        %v943 = vunpack.c.l.b16 %v889
        %v944 = vunpack.c.h.b16 %v889
        %v945 = vunpack.c.l.b16 %v890
        %v946 = vunpack.c.h.b16 %v890
        %v947 = vunpack.c.l.b16 %v891
        %v948 = vunpack.c.h.b16 %v891
        %v949 = vunpack.c.l.b16 %v892
        %v950 = vunpack.c.h.b16 %v892
        %v951 = vunpack.c.l.b16 %v893
        %v952 = vunpack.c.h.b16 %v893
        %v953 = vunpack.c.l.b16 %v894
        %v954 = vunpack.c.h.b16 %v894
        %v955 = vunpack.c.l.b16 %v895
        %v956 = vunpack.c.h.b16 %v895
        %v957 = vunpack.c.l.b16 %v896
        %v958 = vunpack.c.h.b16 %v896
        %v959 = vunpack.c.l.b16 %v897
        %v960 = vunpack.c.h.b16 %v897
        %v961 = vunpack.c.l.b16 %v898
        %v962 = vunpack.c.h.b16 %v898
        %v963 = vunpack.c.l.b16 %v899
        %v964 = vunpack.c.h.b16 %v899
        %v965 = vunpack.c.l.b16 %v900
        %v966 = vunpack.c.h.b16 %v900
        %v967 = vunpack.c.l.b16 %v901
        %v968 = vunpack.c.h.b16 %v901
        %v969 = vunpack.c.l.b16 %v902
        %v970 = vunpack.c.h.b16 %v902
        %v971 = vunpack.c.l.b16 %v903
        %v972 = vunpack.c.h.b16 %v903
        %v973 = vunpack.c.l.b16 %v904
        %v974 = vunpack.c.h.b16 %v904
        %v975 = vpack.c.b16 %v947, %v943
        %v976 = vpack.c.b16 %v948, %v944
        %v977 = vpack.c.b16 %v949, %v945
        %v978 = vpack.c.b16 %v950, %v946
        %v979 = vpack.c.b16 %v955, %v951
        %v980 = vpack.c.b16 %v956, %v952
        %v981 = vpack.c.b16 %v957, %v953
        %v982 = vpack.c.b16 %v958, %v954
        %v983 = vpack.c.b16 %v963, %v959
        %v984 = vpack.c.b16 %v964, %v960
        %v985 = vpack.c.b16 %v965, %v961
        %v986 = vpack.c.b16 %v966, %v962
        %v987 = vpack.c.b16 %v971, %v967
        %v988 = vpack.c.b16 %v972, %v968
        %v989 = vpack.c.b16 %v973, %v969
        %v990 = vpack.c.b16 %v974, %v970
        %v1008 = vsel %vm475, %v888, 0
        %1010 = vmatprep.subr.bf16.mxu0 %v976
        %1011 = vmatpush1.bf16.msra.mxu0 %v975
        %1012 = vmatprep.subr.bf16.mxu0 %v980
        %1013 = vmatpush1.bf16.msra.mxu0 %v979
        %1014 = vmatprep.subr.bf16.mxu0 %v984
        %1015 = vmatpush1.bf16.msra.mxu0 %v983
        %1016 = vmatprep.subr.bf16.mxu0 %v988
        %1017 = vmatpush1.bf16.msra.mxu0 %v987
        %1018 = vmatprep.subr.bf16.mxu0 0
        %1019 = vmatpush1.bf16.msra.mxu0 0
        %1020 = vmatprep.subr.bf16.mxu0 0
        %1021 = vmatpush1.bf16.msra.mxu0 0
        %1022 = vmatprep.subr.bf16.mxu0 0
        %1023 = vmatpush1.bf16.msra.mxu0 0
        %1024 = vmatprep.subr.bf16.mxu0 0
        %1025 = vmatpush1.bf16.msra.mxu0 0
        %1026 = vmatprep.subr.bf16.mxu0 0
        %1027 = vmatpush1.bf16.msra.mxu0 0
        %1028 = vmatprep.subr.bf16.mxu0 0
        %1029 = vmatpush1.bf16.msra.mxu0 0
        %1030 = vmatprep.subr.bf16.mxu0 0
        %1031 = vmatpush1.bf16.msra.mxu0 0
        %1032 = vmatprep.subr.bf16.mxu0 0
        %1033 = vmatpush1.bf16.msra.mxu0 0
        %1034 = vmatprep.subr.bf16.mxu0 0
        %1035 = vmatpush1.bf16.msra.mxu0 0
        %1036 = vmatprep.subr.bf16.mxu0 0
        %1037 = vmatpush1.bf16.msra.mxu0 0
        %1038 = vmatprep.subr.bf16.mxu0 0
        %1039 = vmatpush1.bf16.msra.mxu0 0
        %1040 = vmatprep.subr.bf16.mxu0 0
        %1041 = vmatpush1.bf16.msra.mxu0 0
        %1042 = vmatprep.mubr.bf16.mxu0 0
        %1043 = vmatmul.mubr.bf16.gmra.mrb[0].mxu0 %v1008
        %v1044 = vpop.f32.mrb[0].mxu0
        %v1045 = vadd.f32 %v910, %v1044
        %v1046 = vpop.f32.mrb[0].mxu0
        %v1047 = vadd.f32 %v914, %v1046
        %v1048 = vpop.f32.mrb[0].mxu0
        %v1049 = vpop.f32.mrb[0].mxu0
        %1050 = vdwg.mxu0
        %1051 = vmatprep.subr.bf16.mxu0 %v978
        %1052 = vmatpush1.bf16.msra.mxu0 %v977
        %1053 = vmatprep.subr.bf16.mxu0 %v982
        %1054 = vmatpush1.bf16.msra.mxu0 %v981
        %1055 = vmatprep.subr.bf16.mxu0 %v986
        %1056 = vmatpush1.bf16.msra.mxu0 %v985
        %1057 = vmatprep.subr.bf16.mxu0 %v990
        %1058 = vmatpush1.bf16.msra.mxu0 %v989
        %1059 = vmatprep.subr.bf16.mxu0 0
        %1060 = vmatpush1.bf16.msra.mxu0 0
        %1061 = vmatprep.subr.bf16.mxu0 0
        %1062 = vmatpush1.bf16.msra.mxu0 0
        %1063 = vmatprep.subr.bf16.mxu0 0
        %1064 = vmatpush1.bf16.msra.mxu0 0
        %1065 = vmatprep.subr.bf16.mxu0 0
        %1066 = vmatpush1.bf16.msra.mxu0 0
        %1067 = vmatprep.subr.bf16.mxu0 0
        %1068 = vmatpush1.bf16.msra.mxu0 0
        %1069 = vmatprep.subr.bf16.mxu0 0
        %1070 = vmatpush1.bf16.msra.mxu0 0
        %1071 = vmatprep.subr.bf16.mxu0 0
        %1072 = vmatpush1.bf16.msra.mxu0 0
        %1073 = vmatprep.subr.bf16.mxu0 0
        %1074 = vmatpush1.bf16.msra.mxu0 0
        %1075 = vmatprep.subr.bf16.mxu0 0
        %1076 = vmatpush1.bf16.msra.mxu0 0
        %1077 = vmatprep.subr.bf16.mxu0 0
        %1078 = vmatpush1.bf16.msra.mxu0 0
        %1079 = vmatprep.subr.bf16.mxu0 0
        %1080 = vmatpush1.bf16.msra.mxu0 0
        %1081 = vmatprep.subr.bf16.mxu0 0
        %1082 = vmatpush1.bf16.msra.mxu0 0
        %1083 = vmatprep.mubr.bf16.mxu0 0
        %1084 = vmatmul.mubr.bf16.gmra.mrb[0].mxu0 %v1008
        %v1085 = vpop.f32.mrb[0].mxu0
        %v1086 = vadd.f32 %v918, %v1085
        %v1087 = vpop.f32.mrb[0].mxu0
        %v1088 = vadd.f32 %v922, %v1087
        %v1089 = vpop.f32.mrb[0].mxu0
        %v1090 = vpop.f32.mrb[0].mxu0
        %1091 = vdwg.mxu0
        %v1092 = vxor.u32 %v1086, 2147483648
        %v1093 = vxor.u32 %v1088, 2147483648
        %v1094 = vmul.f32 %v1092, 1.442695
        %v1095 = vpow.pop %v1094
        %v1096 = vmul.f32 %v1093, 1.442695
        %v1097 = vpow.pop %v1096
        %v1098 = vadd.f32 %v1095, 1.0
        %v1099 = vadd.f32 %v1097, 1.0
        %v1100 = vrcp.pop %v1098
        %v1101 = vmul.f32 1.0, %v1100
        %v1102 = vrcp.pop %v1099
        %v1103 = vmul.f32 1.0, %v1102
        %v1104 = vmul.f32 %v1086, %v1101
        %v1105 = vmul.f32 %v1088, %v1103
        %v1106 = vmul.f32 %v1045, %v1104
        %v1107 = vmul.f32 %v1047, %v1105
        %v1108 = vpack.c.bf16 %v1106, %v1106
        %v1109 = vpack.c.bf16 %v1107, %v1107
        %v1110 = vld [vmem:[%s10] sm:$0xf]
        %v1111 = vld [vmem:[%s10 + $0x4] sm:$0xf]
        %v1112 = vld [vmem:[%s10 + $0x8] sm:$0xf]
        %v1113 = vld [vmem:[%s10 + $0xc] sm:$0xf]
        %v1114 = vld [vmem:[%s10 + $0x10] sm:$0xf]
        %v1115 = vld [vmem:[%s10 + $0x14] sm:$0xf]
        %v1116 = vld [vmem:[%s10 + $0x18] sm:$0xf]
        %v1117 = vld [vmem:[%s10 + $0x1c] sm:$0xf]
        %v1118 = vld [vmem:[%s10 + $0x20] sm:$0xf]
        %v1119 = vld [vmem:[%s10 + $0x24] sm:$0xf]
        %v1120 = vld [vmem:[%s10 + $0x28] sm:$0xf]
        %v1121 = vld [vmem:[%s10 + $0x2c] sm:$0xf]
        %v1122 = vld [vmem:[%s10 + $0x30] sm:$0xf]
        %v1123 = vld [vmem:[%s10 + $0x34] sm:$0xf]
        %v1124 = vld [vmem:[%s10 + $0x38] sm:$0xf]
        %v1125 = vld [vmem:[%s10 + $0x3c] sm:$0xf]
        %v1126 = vld [vmem:[%s10 + $0x40] sm:$0xf]
        %v1127 = vld [vmem:[%s10 + $0x44] sm:$0xf]
        %v1128 = vld [vmem:[%s10 + $0x48] sm:$0xf]
        %v1129 = vld [vmem:[%s10 + $0x4c] sm:$0xf]
        %v1130 = vld [vmem:[%s10 + $0x50] sm:$0xf]
        %v1131 = vld [vmem:[%s10 + $0x54] sm:$0xf]
        %v1132 = vld [vmem:[%s10 + $0x58] sm:$0xf]
        %v1133 = vld [vmem:[%s10 + $0x5c] sm:$0xf]
        %v1134 = vld [vmem:[%s10 + $0x60] sm:$0xf]
        %v1135 = vld [vmem:[%s10 + $0x64] sm:$0xf]
        %v1136 = vld [vmem:[%s10 + $0x68] sm:$0xf]
        %v1137 = vld [vmem:[%s10 + $0x6c] sm:$0xf]
        %v1138 = vld [vmem:[%s10 + $0x70] sm:$0xf]
        %v1139 = vld [vmem:[%s10 + $0x74] sm:$0xf]
        %v1140 = vld [vmem:[%s10 + $0x78] sm:$0xf]
        %v1141 = vld [vmem:[%s10 + $0x7c] sm:$0xf]
        %v1174 = vunpack.c.l.b16 %v1110
        %v1175 = vunpack.c.l.b16 %v1111
        %v1176 = vunpack.c.l.b16 %v1112
        %v1177 = vunpack.c.l.b16 %v1113
        %v1178 = vunpack.c.l.b16 %v1114
        %v1179 = vunpack.c.l.b16 %v1115
        %v1180 = vunpack.c.l.b16 %v1116
        %v1181 = vunpack.c.l.b16 %v1117
        %v1182 = vunpack.c.l.b16 %v1118
        %v1183 = vunpack.c.l.b16 %v1119
        %v1184 = vunpack.c.l.b16 %v1120
        %v1185 = vunpack.c.l.b16 %v1121
        %v1186 = vunpack.c.l.b16 %v1122
        %v1187 = vunpack.c.l.b16 %v1123
        %v1188 = vunpack.c.l.b16 %v1124
        %v1189 = vunpack.c.l.b16 %v1125
        %v1190 = vunpack.c.l.b16 %v1126
        %v1191 = vunpack.c.l.b16 %v1127
        %v1192 = vunpack.c.l.b16 %v1128
        %v1193 = vunpack.c.l.b16 %v1129
        %v1194 = vunpack.c.l.b16 %v1130
        %v1195 = vunpack.c.l.b16 %v1131
        %v1196 = vunpack.c.l.b16 %v1132
        %v1197 = vunpack.c.l.b16 %v1133
        %v1198 = vunpack.c.l.b16 %v1134
        %v1199 = vunpack.c.l.b16 %v1135
        %v1200 = vunpack.c.l.b16 %v1136
        %v1201 = vunpack.c.l.b16 %v1137
        %v1202 = vunpack.c.l.b16 %v1138
        %v1203 = vunpack.c.l.b16 %v1139
        %v1204 = vunpack.c.l.b16 %v1140
        %v1205 = vunpack.c.l.b16 %v1141
        %v1206 = vpack.c.b16 %v1175, %v1174
        %v1207 = vpack.c.b16 %v1177, %v1176
        %v1208 = vpack.c.b16 %v1179, %v1178
        %v1209 = vpack.c.b16 %v1181, %v1180
        %v1210 = vpack.c.b16 %v1183, %v1182
        %v1211 = vpack.c.b16 %v1185, %v1184
        %v1212 = vpack.c.b16 %v1187, %v1186
        %v1213 = vpack.c.b16 %v1189, %v1188
        %v1214 = vpack.c.b16 %v1191, %v1190
        %v1215 = vpack.c.b16 %v1193, %v1192
        %v1216 = vpack.c.b16 %v1195, %v1194
        %v1217 = vpack.c.b16 %v1197, %v1196
        %v1218 = vpack.c.b16 %v1199, %v1198
        %v1219 = vpack.c.b16 %v1201, %v1200
        %v1220 = vpack.c.b16 %v1203, %v1202
        %v1221 = vpack.c.b16 %v1205, %v1204
        %1238 = vmatprep.subr.bf16.mxu0 0
        %1239 = vmatpush1.bf16.msra.mxu0 %v1206
        %1240 = vmatprep.subr.bf16.mxu0 0
        %1241 = vmatpush1.bf16.msra.mxu0 %v1207
        %1242 = vmatprep.subr.bf16.mxu0 0
        %1243 = vmatpush1.bf16.msra.mxu0 %v1208
        %1244 = vmatprep.subr.bf16.mxu0 0
        %1245 = vmatpush1.bf16.msra.mxu0 %v1209
        %1246 = vmatprep.subr.bf16.mxu0 0
        %1247 = vmatpush1.bf16.msra.mxu0 %v1210
        %1248 = vmatprep.subr.bf16.mxu0 0
        %1249 = vmatpush1.bf16.msra.mxu0 %v1211
        %1250 = vmatprep.subr.bf16.mxu0 0
        %1251 = vmatpush1.bf16.msra.mxu0 %v1212
        %1252 = vmatprep.subr.bf16.mxu0 0
        %1253 = vmatpush1.bf16.msra.mxu0 %v1213
        %1254 = vmatprep.subr.bf16.mxu0 0
        %1255 = vmatpush1.bf16.msra.mxu0 %v1214
        %1256 = vmatprep.subr.bf16.mxu0 0
        %1257 = vmatpush1.bf16.msra.mxu0 %v1215
        %1258 = vmatprep.subr.bf16.mxu0 0
        %1259 = vmatpush1.bf16.msra.mxu0 %v1216
        %1260 = vmatprep.subr.bf16.mxu0 0
        %1261 = vmatpush1.bf16.msra.mxu0 %v1217
        %1262 = vmatprep.subr.bf16.mxu0 0
        %1263 = vmatpush1.bf16.msra.mxu0 %v1218
        %1264 = vmatprep.subr.bf16.mxu0 0
        %1265 = vmatpush1.bf16.msra.mxu0 %v1219
        %1266 = vmatprep.subr.bf16.mxu0 0
        %1267 = vmatpush1.bf16.msra.mxu0 %v1220
        %1268 = vmatprep.subr.bf16.mxu0 0
        %1269 = vmatpush1.bf16.msra.mxu0 %v1221
        %1270 = vmatprep.mubr.bf16.mxu0 %v1109
        %1271 = vmatmul.mubr.bf16.gmra.mrb[0].mxu0 %v1108
        %v1272 = vpop.f32.mrb[0].mxu0
        %v1273 = vadd.f32 0.0, %v1272
        %v1274 = vpop.f32.mrb[0].mxu0
        %v1275 = vpop.f32.mrb[0].mxu0
        %v1276 = vpop.f32.mrb[0].mxu0
        %1277 = vdwg.mxu0
        %v1278 = vadd.f32 %v865, %v1273
        %v1279 = vld [vmem:[%s11] sm:$0x1]
        %v1281 = vlaneseq
        %v1282 = vshrl.u32 %v1281, 7
        %v1283 = vsub.s32 0, %v1282
        %v1284 = vrot.slane %v1279, %v1283
        %v1286 = vadd.f32 %v1278, %v1284
        %s1287 = scalar_lea.vmem %s5, 2
        %v1288 = vld [vmem:[%s1287] sm:$0x1]
        %v1289 = vsel %vm475, %v1286, 0.0
        %1290 = vadd.xlane.f32.xlu0 %v1289
        %v1291 = vpop.xlane.xlu0 %1290
        %v1292 = vmul.f32 %v1291, %v479
        %v1293 = vsub.f32 %v1286, %v1292
        %v1294 = vmul.f32 %v1293, %v1293
        %v1295 = vsel %vm475, %v1294, 0.0
        %1296 = vadd.xlane.f32.xlu0 %v1295
        %v1297 = vpop.xlane.xlu0 %1296
        %v1298 = vmul.f32 %v1297, %v479
        %v1299 = vadd.f32 %v1298, 1e-05
        %v1300 = vrsqrt.pop %v1299
        %v1301 = vmul.f32 %v1293, %v1300
        %v1303 = vlaneseq
        %v1304 = vshrl.u32 %v1303, 7
        %v1305 = vsub.s32 0, %v1304
        %v1306 = vrot.slane %v1288, %v1305
        %v1308 = vmul.f32 %v1301, %v1306
        %v1309 = vpack.c.bf16 %v1308, %v1308
        %s1310 = scalar_lea.vmem %s6, 96
        %v1311 = vld [vmem:[%s1310] sm:$0xff]
        %v1312 = vld [vmem:[%s1310 + $0x8] sm:$0xf]
        %v1313 = vld [vmem:[%s1310 + $0xc] sm:$0xff]
        %v1314 = vld [vmem:[%s1310 + $0x14] sm:$0xf]
        %v1315 = vld [vmem:[%s1310 + $0x18] sm:$0xff]
        %v1316 = vld [vmem:[%s1310 + $0x20] sm:$0xf]
        %v1317 = vld [vmem:[%s1310 + $0x24] sm:$0xff]
        %v1318 = vld [vmem:[%s1310 + $0x2c] sm:$0xf]
        %v1319 = vld [vmem:[%s1310 + $0x30] sm:$0xff]
        %v1320 = vld [vmem:[%s1310 + $0x38] sm:$0xf]
        %v1321 = vld [vmem:[%s1310 + $0x3c] sm:$0xff]
        %v1322 = vld [vmem:[%s1310 + $0x44] sm:$0xf]
        %v1323 = vld [vmem:[%s1310 + $0x48] sm:$0xff]
        %v1324 = vld [vmem:[%s1310 + $0x50] sm:$0xf]
        %v1325 = vld [vmem:[%s1310 + $0x54] sm:$0xff]
        %v1326 = vld [vmem:[%s1310 + $0x5c] sm:$0xf]
        %v1343 = vunpack.c.l.b16 %v1311
        %v1344 = vunpack.c.h.b16 %v1311
        %v1345 = vunpack.c.l.b16 %v1312
        %v1346 = vunpack.c.l.b16 %v1313
        %v1347 = vunpack.c.h.b16 %v1313
        %v1348 = vunpack.c.l.b16 %v1314
        %v1349 = vunpack.c.l.b16 %v1315
        %v1350 = vunpack.c.h.b16 %v1315
        %v1351 = vunpack.c.l.b16 %v1316
        %v1352 = vunpack.c.l.b16 %v1317
        %v1353 = vunpack.c.h.b16 %v1317
        %v1354 = vunpack.c.l.b16 %v1318
        %v1355 = vunpack.c.l.b16 %v1319
        %v1356 = vunpack.c.h.b16 %v1319
        %v1357 = vunpack.c.l.b16 %v1320
        %v1358 = vunpack.c.l.b16 %v1321
        %v1359 = vunpack.c.h.b16 %v1321
        %v1360 = vunpack.c.l.b16 %v1322
        %v1361 = vunpack.c.l.b16 %v1323
        %v1362 = vunpack.c.h.b16 %v1323
        %v1363 = vunpack.c.l.b16 %v1324
        %v1364 = vunpack.c.l.b16 %v1325
        %v1365 = vunpack.c.h.b16 %v1325
        %v1366 = vunpack.c.l.b16 %v1326
        %v1367 = vpack.c.b16 %v1346, %v1343
        %v1368 = vpack.c.b16 %v1347, %v1344
        %v1369 = vpack.c.b16 %v1348, %v1345
        %v1370 = vpack.c.b16 %v1352, %v1349
        %v1371 = vpack.c.b16 %v1353, %v1350
        %v1372 = vpack.c.b16 %v1354, %v1351
        %v1373 = vpack.c.b16 %v1358, %v1355
        %v1374 = vpack.c.b16 %v1359, %v1356
        %v1375 = vpack.c.b16 %v1360, %v1357
        %v1376 = vpack.c.b16 %v1364, %v1361
        %v1377 = vpack.c.b16 %v1365, %v1362
        %v1378 = vpack.c.b16 %v1366, %v1363
        %v1392 = vsel %vm475, %v1309, 0
        %1394 = vmatprep.subr.bf16.mxu0 %v1368
        %1395 = vmatpush1.bf16.msra.mxu0 %v1367
        %1396 = vmatprep.subr.bf16.mxu0 %v1371
        %1397 = vmatpush1.bf16.msra.mxu0 %v1370
        %1398 = vmatprep.subr.bf16.mxu0 %v1374
        %1399 = vmatpush1.bf16.msra.mxu0 %v1373
        %1400 = vmatprep.subr.bf16.mxu0 %v1377
        %1401 = vmatpush1.bf16.msra.mxu0 %v1376
        %1402 = vmatprep.subr.bf16.mxu0 0
        %1403 = vmatpush1.bf16.msra.mxu0 0
        %1404 = vmatprep.subr.bf16.mxu0 0
        %1405 = vmatpush1.bf16.msra.mxu0 0
        %1406 = vmatprep.subr.bf16.mxu0 0
        %1407 = vmatpush1.bf16.msra.mxu0 0
        %1408 = vmatprep.subr.bf16.mxu0 0
        %1409 = vmatpush1.bf16.msra.mxu0 0
        %1410 = vmatprep.subr.bf16.mxu0 0
        %1411 = vmatpush1.bf16.msra.mxu0 0
        %1412 = vmatprep.subr.bf16.mxu0 0
        %1413 = vmatpush1.bf16.msra.mxu0 0
        %1414 = vmatprep.subr.bf16.mxu0 0
        %1415 = vmatpush1.bf16.msra.mxu0 0
        %1416 = vmatprep.subr.bf16.mxu0 0
        %1417 = vmatpush1.bf16.msra.mxu0 0
        %1418 = vmatprep.subr.bf16.mxu0 0
        %1419 = vmatpush1.bf16.msra.mxu0 0
        %1420 = vmatprep.subr.bf16.mxu0 0
        %1421 = vmatpush1.bf16.msra.mxu0 0
        %1422 = vmatprep.subr.bf16.mxu0 0
        %1423 = vmatpush1.bf16.msra.mxu0 0
        %1424 = vmatprep.subr.bf16.mxu0 0
        %1425 = vmatpush1.bf16.msra.mxu0 0
        %1426 = vmatprep.mubr.bf16.mxu0 0
        %1427 = vmatmul.mubr.bf16.gmra.mrb[0].mxu0 %v1392
        %v1428 = vpop.f32.mrb[0].mxu0
        %v1429 = vadd.f32 0.0, %v1428
        %v1430 = vpop.f32.mrb[0].mxu0
        %v1431 = vadd.f32 0.0, %v1430
        %v1432 = vpop.f32.mrb[0].mxu0
        %v1433 = vpop.f32.mrb[0].mxu0
        %1434 = vdwg.mxu0
        %1435 = vmatprep.subr.bf16.mxu0 0
        %1436 = vmatpush1.bf16.msra.mxu0 %v1369
        %1437 = vmatprep.subr.bf16.mxu0 0
        %1438 = vmatpush1.bf16.msra.mxu0 %v1372
        %1439 = vmatprep.subr.bf16.mxu0 0
        %1440 = vmatpush1.bf16.msra.mxu0 %v1375
        %1441 = vmatprep.subr.bf16.mxu0 0
        %1442 = vmatpush1.bf16.msra.mxu0 %v1378
        %1443 = vmatprep.subr.bf16.mxu0 0
        %1444 = vmatpush1.bf16.msra.mxu0 0
        %1445 = vmatprep.subr.bf16.mxu0 0
        %1446 = vmatpush1.bf16.msra.mxu0 0
        %1447 = vmatprep.subr.bf16.mxu0 0
        %1448 = vmatpush1.bf16.msra.mxu0 0
        %1449 = vmatprep.subr.bf16.mxu0 0
        %1450 = vmatpush1.bf16.msra.mxu0 0
        %1451 = vmatprep.subr.bf16.mxu0 0
        %1452 = vmatpush1.bf16.msra.mxu0 0
        %1453 = vmatprep.subr.bf16.mxu0 0
        %1454 = vmatpush1.bf16.msra.mxu0 0
        %1455 = vmatprep.subr.bf16.mxu0 0
        %1456 = vmatpush1.bf16.msra.mxu0 0
        %1457 = vmatprep.subr.bf16.mxu0 0
        %1458 = vmatpush1.bf16.msra.mxu0 0
        %1459 = vmatprep.subr.bf16.mxu0 0
        %1460 = vmatpush1.bf16.msra.mxu0 0
        %1461 = vmatprep.subr.bf16.mxu0 0
        %1462 = vmatpush1.bf16.msra.mxu0 0
        %1463 = vmatprep.subr.bf16.mxu0 0
        %1464 = vmatpush1.bf16.msra.mxu0 0
        %1465 = vmatprep.subr.bf16.mxu0 0
        %1466 = vmatpush1.bf16.msra.mxu0 0
        %1467 = vmatprep.mubr.bf16.mxu0 0
        %1468 = vmatmul.mubr.bf16.gmra.mrb[0].mxu0 %v1392
        %v1469 = vpop.f32.mrb[0].mxu0
        %v1470 = vadd.f32 0.0, %v1469
        %v1471 = vpop.f32.mrb[0].mxu0
        %v1472 = vpop.f32.mrb[0].mxu0
        %v1473 = vpop.f32.mrb[0].mxu0
        %1474 = vdwg.mxu0
        %v1475 = vmul.f32 %v1429, %v410
        %v1476 = vmul.f32 %v1429, %v665
        %1478 = vrot.lane.b32.xlu0 %v1476, 64
        %v1479 = vpop.permute.xlu0 %1478
        %v1481 = vadd.f32 %v1475, %v1479
        %v1482 = vmul.f32 %v1431, %v410
        %v1483 = vmul.f32 %v1431, %v665
        %1485 = vrot.lane.b32.xlu0 %v1483, 64
        %v1486 = vpop.permute.xlu0 %1485
        %v1488 = vadd.f32 %v1482, %v1486
        %v1489 = vpack.c.bf16 %v1481, %v1481
        %v1490 = vpack.c.bf16 %v1488, %v1488
        %v1491 = vpack.c.bf16 %v1470, %v1470
        %v1493 = vsel %vm475, %v1489, 0
        %v1496 = vsel %vm475, %v1490, 0
        %1498 = vmatprep.subr.bf16.mxu0 0
        %1499 = vmatpush1.bf16.xpose.msra.mxu0 %v1496
        %1500 = vmatprep.subr.bf16.mxu0 0
        %1501 = vmatpush1.bf16.xpose.msra.mxu0 0
        %1502 = vmatprep.subr.bf16.mxu0 0
        %1503 = vmatpush1.bf16.xpose.msra.mxu0 0
        %1504 = vmatprep.subr.bf16.mxu0 0
        %1505 = vmatpush1.bf16.xpose.msra.mxu0 0
        %1506 = vmatprep.subr.bf16.mxu0 0
        %1507 = vmatpush1.bf16.xpose.msra.mxu0 0
        %1508 = vmatprep.subr.bf16.mxu0 0
        %1509 = vmatpush1.bf16.xpose.msra.mxu0 0
        %1510 = vmatprep.subr.bf16.mxu0 0
        %1511 = vmatpush1.bf16.xpose.msra.mxu0 0
        %1512 = vmatprep.subr.bf16.mxu0 0
        %1513 = vmatpush1.bf16.xpose.msra.mxu0 0
        %1514 = vmatprep.subr.bf16.mxu0 0
        %1515 = vmatpush1.bf16.xpose.msra.mxu0 0
        %1516 = vmatprep.subr.bf16.mxu0 0
        %1517 = vmatpush1.bf16.xpose.msra.mxu0 0
        %1518 = vmatprep.subr.bf16.mxu0 0
        %1519 = vmatpush1.bf16.xpose.msra.mxu0 0
        %1520 = vmatprep.subr.bf16.mxu0 0
        %1521 = vmatpush1.bf16.xpose.msra.mxu0 0
        %1522 = vmatprep.subr.bf16.mxu0 0
        %1523 = vmatpush1.bf16.xpose.msra.mxu0 0
        %1524 = vmatprep.subr.bf16.mxu0 0
        %1525 = vmatpush1.bf16.xpose.msra.mxu0 0
        %1526 = vmatprep.subr.bf16.mxu0 0
        %1527 = vmatpush1.bf16.xpose.msra.mxu0 0
        %1528 = vmatprep.subr.bf16.mxu0 0
        %1529 = vmatpush1.bf16.xpose.msra.mxu0 0
        %1530 = vmatprep.mubr.bf16.mxu0 0
        %1531 = vmatmul.mubr.bf16.gmra.mrb[0].mxu0 %v1493
        %v1532 = vpop.f32.mrb[0].mxu0
        %v1533 = vadd.f32 0.0, %v1532
        %v1534 = vpop.f32.mrb[0].mxu0
        %v1535 = vpop.f32.mrb[0].mxu0
        %v1536 = vpop.f32.mrb[0].mxu0
        %1537 = vdwg.mxu0
        %v1538 = vsel %vm729, %v1533, -inf
        %1539 = vmax.xlane.f32.xlu0 %v1538
        %v1540 = vpop.xlane.xlu0 %1539
        %v1541 = vsub.f32 %v1533, %v1540
        %v1542 = vmul.f32 %v1541, 1.442695
        %v1543 = vpow.pop %v1542
        %v1544 = vsel %vm729, %v1543, 0.0
        %1545 = vadd.xlane.f32.xlu0 %v1544
        %v1546 = vpop.xlane.xlu0 %1545
        %v1547 = vrcp.pop %v1546
        %v1548 = vmul.f32 %v1543, %v1547
        %v1549 = vpack.c.bf16 %v1548, %v1548
        %v1551 = vsel %vm729, %v1549, 0
        %v1554 = vsel %vm745, %v1491, 0
        %1556 = vmatprep.subr.bf16.mxu0 0
        %1557 = vmatpush1.bf16.msra.mxu0 %v1554
        %1558 = vmatprep.subr.bf16.mxu0 0
        %1559 = vmatpush1.bf16.msra.mxu0 0
        %1560 = vmatprep.subr.bf16.mxu0 0
        %1561 = vmatpush1.bf16.msra.mxu0 0
        %1562 = vmatprep.subr.bf16.mxu0 0
        %1563 = vmatpush1.bf16.msra.mxu0 0
        %1564 = vmatprep.subr.bf16.mxu0 0
        %1565 = vmatpush1.bf16.msra.mxu0 0
        %1566 = vmatprep.subr.bf16.mxu0 0
        %1567 = vmatpush1.bf16.msra.mxu0 0
        %1568 = vmatprep.subr.bf16.mxu0 0
        %1569 = vmatpush1.bf16.msra.mxu0 0
        %1570 = vmatprep.subr.bf16.mxu0 0
        %1571 = vmatpush1.bf16.msra.mxu0 0
        %1572 = vmatprep.subr.bf16.mxu0 0
        %1573 = vmatpush1.bf16.msra.mxu0 0
        %1574 = vmatprep.subr.bf16.mxu0 0
        %1575 = vmatpush1.bf16.msra.mxu0 0
        %1576 = vmatprep.subr.bf16.mxu0 0
        %1577 = vmatpush1.bf16.msra.mxu0 0
        %1578 = vmatprep.subr.bf16.mxu0 0
        %1579 = vmatpush1.bf16.msra.mxu0 0
        %1580 = vmatprep.subr.bf16.mxu0 0
        %1581 = vmatpush1.bf16.msra.mxu0 0
        %1582 = vmatprep.subr.bf16.mxu0 0
        %1583 = vmatpush1.bf16.msra.mxu0 0
        %1584 = vmatprep.subr.bf16.mxu0 0
        %1585 = vmatpush1.bf16.msra.mxu0 0
        %1586 = vmatprep.subr.bf16.mxu0 0
        %1587 = vmatpush1.bf16.msra.mxu0 0
        %1588 = vmatprep.mubr.bf16.mxu0 0
        %1589 = vmatmul.mubr.bf16.gmra.mrb[0].mxu0 %v1551
        %v1590 = vpop.f32.mrb[0].mxu0
        %v1591 = vadd.f32 0.0, %v1590
        %v1592 = vpop.f32.mrb[0].mxu0
        %v1593 = vpop.f32.mrb[0].mxu0
        %v1594 = vpop.f32.mrb[0].mxu0
        %1595 = vdwg.mxu0
        %v1596 = vpack.c.bf16 %v1591, %v1591
        %s1597 = scalar_lea.vmem %s7, 32
        %v1598 = vld [vmem:[%s1597] sm:$0xf]
        %v1599 = vld [vmem:[%s1597 + $0x4] sm:$0xf]
        %v1600 = vld [vmem:[%s1597 + $0x8] sm:$0xf]
        %v1601 = vld [vmem:[%s1597 + $0xc] sm:$0xf]
        %v1602 = vld [vmem:[%s1597 + $0x10] sm:$0xf]
        %v1603 = vld [vmem:[%s1597 + $0x14] sm:$0xf]
        %v1604 = vld [vmem:[%s1597 + $0x18] sm:$0xf]
        %v1605 = vld [vmem:[%s1597 + $0x1c] sm:$0xf]
        %v1614 = vunpack.c.l.b16 %v1598
        %v1615 = vunpack.c.l.b16 %v1599
        %v1616 = vunpack.c.l.b16 %v1600
        %v1617 = vunpack.c.l.b16 %v1601
        %v1618 = vunpack.c.l.b16 %v1602
        %v1619 = vunpack.c.l.b16 %v1603
        %v1620 = vunpack.c.l.b16 %v1604
        %v1621 = vunpack.c.l.b16 %v1605
        %v1622 = vpack.c.b16 %v1615, %v1614
        %v1623 = vpack.c.b16 %v1617, %v1616
        %v1624 = vpack.c.b16 %v1619, %v1618
        %v1625 = vpack.c.b16 %v1621, %v1620
        %v1631 = vsel %vm475, %v1596, 0
        %1633 = vmatprep.subr.bf16.mxu0 0
        %1634 = vmatpush1.bf16.msra.mxu0 %v1622
        %1635 = vmatprep.subr.bf16.mxu0 0
        %1636 = vmatpush1.bf16.msra.mxu0 %v1623
        %1637 = vmatprep.subr.bf16.mxu0 0
        %1638 = vmatpush1.bf16.msra.mxu0 %v1624
        %1639 = vmatprep.subr.bf16.mxu0 0
        %1640 = vmatpush1.bf16.msra.mxu0 %v1625
        %1641 = vmatprep.subr.bf16.mxu0 0
        %1642 = vmatpush1.bf16.msra.mxu0 0
        %1643 = vmatprep.subr.bf16.mxu0 0
        %1644 = vmatpush1.bf16.msra.mxu0 0
        %1645 = vmatprep.subr.bf16.mxu0 0
        %1646 = vmatpush1.bf16.msra.mxu0 0
        %1647 = vmatprep.subr.bf16.mxu0 0
        %1648 = vmatpush1.bf16.msra.mxu0 0
        %1649 = vmatprep.subr.bf16.mxu0 0
        %1650 = vmatpush1.bf16.msra.mxu0 0
        %1651 = vmatprep.subr.bf16.mxu0 0
        %1652 = vmatpush1.bf16.msra.mxu0 0
        %1653 = vmatprep.subr.bf16.mxu0 0
        %1654 = vmatpush1.bf16.msra.mxu0 0
        %1655 = vmatprep.subr.bf16.mxu0 0
        %1656 = vmatpush1.bf16.msra.mxu0 0
        %1657 = vmatprep.subr.bf16.mxu0 0
        %1658 = vmatpush1.bf16.msra.mxu0 0
        %1659 = vmatprep.subr.bf16.mxu0 0
        %1660 = vmatpush1.bf16.msra.mxu0 0
        %1661 = vmatprep.subr.bf16.mxu0 0
        %1662 = vmatpush1.bf16.msra.mxu0 0
        %1663 = vmatprep.subr.bf16.mxu0 0
        %1664 = vmatpush1.bf16.msra.mxu0 0
        %1665 = vmatprep.mubr.bf16.mxu0 0
        %1666 = vmatmul.mubr.bf16.gmra.mrb[0].mxu0 %v1631
        %v1667 = vpop.f32.mrb[0].mxu0
        %v1668 = vadd.f32 0.0, %v1667
        %v1669 = vpop.f32.mrb[0].mxu0
        %v1670 = vpop.f32.mrb[0].mxu0
        %v1671 = vpop.f32.mrb[0].mxu0
        %1672 = vdwg.mxu0
        %v1673 = vadd.f32 %v1286, %v1668
        %s1674 = scalar_lea.vmem %s5, 3
        %v1675 = vld [vmem:[%s1674] sm:$0x1]
        %v1676 = vsel %vm475, %v1673, 0.0
        %1677 = vadd.xlane.f32.xlu0 %v1676
        %v1678 = vpop.xlane.xlu0 %1677
        %v1679 = vmul.f32 %v1678, %v479
        %v1680 = vsub.f32 %v1673, %v1679
        %v1681 = vmul.f32 %v1680, %v1680
        %v1682 = vsel %vm475, %v1681, 0.0
        %1683 = vadd.xlane.f32.xlu0 %v1682
        %v1684 = vpop.xlane.xlu0 %1683
        %v1685 = vmul.f32 %v1684, %v479
        %v1686 = vadd.f32 %v1685, 1e-05
        %v1687 = vrsqrt.pop %v1686
        %v1688 = vmul.f32 %v1680, %v1687
        %v1690 = vlaneseq
        %v1691 = vshrl.u32 %v1690, 7
        %v1692 = vsub.s32 0, %v1691
        %v1693 = vrot.slane %v1675, %v1692
        %v1695 = vmul.f32 %v1688, %v1693
        %v1696 = vpack.c.bf16 %v1695, %v1695
        %s1697 = scalar_lea.vmem %s8, 128
        %v1698 = vld [vmem:[%s1697] sm:$0xff]
        %v1699 = vld [vmem:[%s1697 + $0x8] sm:$0xff]
        %v1700 = vld [vmem:[%s1697 + $0x10] sm:$0xff]
        %v1701 = vld [vmem:[%s1697 + $0x18] sm:$0xff]
        %v1702 = vld [vmem:[%s1697 + $0x20] sm:$0xff]
        %v1703 = vld [vmem:[%s1697 + $0x28] sm:$0xff]
        %v1704 = vld [vmem:[%s1697 + $0x30] sm:$0xff]
        %v1705 = vld [vmem:[%s1697 + $0x38] sm:$0xff]
        %v1706 = vld [vmem:[%s1697 + $0x40] sm:$0xff]
        %v1707 = vld [vmem:[%s1697 + $0x48] sm:$0xff]
        %v1708 = vld [vmem:[%s1697 + $0x50] sm:$0xff]
        %v1709 = vld [vmem:[%s1697 + $0x58] sm:$0xff]
        %v1710 = vld [vmem:[%s1697 + $0x60] sm:$0xff]
        %v1711 = vld [vmem:[%s1697 + $0x68] sm:$0xff]
        %v1712 = vld [vmem:[%s1697 + $0x70] sm:$0xff]
        %v1713 = vld [vmem:[%s1697 + $0x78] sm:$0xff]
        %s1714 = scalar_lea.vmem %s9, 4
        %v1715 = vld [vmem:[%s1714] sm:$0xf]
        %v1717 = vlaneseq
        %v1718 = vshrl.u32 %v1717, 7
        %v1719 = vsub.s32 0, %v1718
        %v1720 = vrot.slane %v1715, %v1719
        %v1721 = vlaneseq
        %v1722 = vshrl.u32 %v1721, 7
        %v1723 = vsub.s32 1, %v1722
        %v1724 = vrot.slane %v1715, %v1723
        %v1725 = vlaneseq
        %v1726 = vshrl.u32 %v1725, 7
        %v1727 = vsub.s32 2, %v1726
        %v1728 = vrot.slane %v1715, %v1727
        %v1729 = vlaneseq
        %v1730 = vshrl.u32 %v1729, 7
        %v1731 = vsub.s32 3, %v1730
        %v1732 = vrot.slane %v1715, %v1731
        %v1753 = vunpack.c.l.b16 %v1698
        %v1754 = vunpack.c.h.b16 %v1698
        %v1755 = vunpack.c.l.b16 %v1699
        %v1756 = vunpack.c.h.b16 %v1699
        %v1757 = vunpack.c.l.b16 %v1700
        %v1758 = vunpack.c.h.b16 %v1700
        %v1759 = vunpack.c.l.b16 %v1701
        %v1760 = vunpack.c.h.b16 %v1701
        %v1761 = vunpack.c.l.b16 %v1702
        %v1762 = vunpack.c.h.b16 %v1702
        %v1763 = vunpack.c.l.b16 %v1703
        %v1764 = vunpack.c.h.b16 %v1703
        %v1765 = vunpack.c.l.b16 %v1704
        %v1766 = vunpack.c.h.b16 %v1704
        %v1767 = vunpack.c.l.b16 %v1705
        %v1768 = vunpack.c.h.b16 %v1705
        %v1769 = vunpack.c.l.b16 %v1706
        %v1770 = vunpack.c.h.b16 %v1706
        %v1771 = vunpack.c.l.b16 %v1707
        %v1772 = vunpack.c.h.b16 %v1707
        %v1773 = vunpack.c.l.b16 %v1708
        %v1774 = vunpack.c.h.b16 %v1708
        %v1775 = vunpack.c.l.b16 %v1709
        %v1776 = vunpack.c.h.b16 %v1709
        %v1777 = vunpack.c.l.b16 %v1710
        %v1778 = vunpack.c.h.b16 %v1710
        %v1779 = vunpack.c.l.b16 %v1711
        %v1780 = vunpack.c.h.b16 %v1711
        %v1781 = vunpack.c.l.b16 %v1712
        %v1782 = vunpack.c.h.b16 %v1712
        %v1783 = vunpack.c.l.b16 %v1713
        %v1784 = vunpack.c.h.b16 %v1713
        %v1785 = vpack.c.b16 %v1757, %v1753
        %v1786 = vpack.c.b16 %v1758, %v1754
        %v1787 = vpack.c.b16 %v1759, %v1755
        %v1788 = vpack.c.b16 %v1760, %v1756
        %v1789 = vpack.c.b16 %v1765, %v1761
        %v1790 = vpack.c.b16 %v1766, %v1762
        %v1791 = vpack.c.b16 %v1767, %v1763
        %v1792 = vpack.c.b16 %v1768, %v1764
        %v1793 = vpack.c.b16 %v1773, %v1769
        %v1794 = vpack.c.b16 %v1774, %v1770
        %v1795 = vpack.c.b16 %v1775, %v1771
        %v1796 = vpack.c.b16 %v1776, %v1772
        %v1797 = vpack.c.b16 %v1781, %v1777
        %v1798 = vpack.c.b16 %v1782, %v1778
        %v1799 = vpack.c.b16 %v1783, %v1779
        %v1800 = vpack.c.b16 %v1784, %v1780
        %v1818 = vsel %vm475, %v1696, 0
        %1820 = vmatprep.subr.bf16.mxu0 %v1786
        %1821 = vmatpush1.bf16.msra.mxu0 %v1785
        %1822 = vmatprep.subr.bf16.mxu0 %v1790
        %1823 = vmatpush1.bf16.msra.mxu0 %v1789
        %1824 = vmatprep.subr.bf16.mxu0 %v1794
        %1825 = vmatpush1.bf16.msra.mxu0 %v1793
        %1826 = vmatprep.subr.bf16.mxu0 %v1798
        %1827 = vmatpush1.bf16.msra.mxu0 %v1797
        %1828 = vmatprep.subr.bf16.mxu0 0
        %1829 = vmatpush1.bf16.msra.mxu0 0
        %1830 = vmatprep.subr.bf16.mxu0 0
        %1831 = vmatpush1.bf16.msra.mxu0 0
        %1832 = vmatprep.subr.bf16.mxu0 0
        %1833 = vmatpush1.bf16.msra.mxu0 0
        %1834 = vmatprep.subr.bf16.mxu0 0
        %1835 = vmatpush1.bf16.msra.mxu0 0
        %1836 = vmatprep.subr.bf16.mxu0 0
        %1837 = vmatpush1.bf16.msra.mxu0 0
        %1838 = vmatprep.subr.bf16.mxu0 0
        %1839 = vmatpush1.bf16.msra.mxu0 0
        %1840 = vmatprep.subr.bf16.mxu0 0
        %1841 = vmatpush1.bf16.msra.mxu0 0
        %1842 = vmatprep.subr.bf16.mxu0 0
        %1843 = vmatpush1.bf16.msra.mxu0 0
        %1844 = vmatprep.subr.bf16.mxu0 0
        %1845 = vmatpush1.bf16.msra.mxu0 0
        %1846 = vmatprep.subr.bf16.mxu0 0
        %1847 = vmatpush1.bf16.msra.mxu0 0
        %1848 = vmatprep.subr.bf16.mxu0 0
        %1849 = vmatpush1.bf16.msra.mxu0 0
        %1850 = vmatprep.subr.bf16.mxu0 0
        %1851 = vmatpush1.bf16.msra.mxu0 0
        %1852 = vmatprep.mubr.bf16.mxu0 0
        %1853 = vmatmul.mubr.bf16.gmra.mrb[0].mxu0 %v1818
        %v1854 = vpop.f32.mrb[0].mxu0
        %v1855 = vadd.f32 %v1720, %v1854
        %v1856 = vpop.f32.mrb[0].mxu0
        %v1857 = vadd.f32 %v1724, %v1856
        %v1858 = vpop.f32.mrb[0].mxu0
        %v1859 = vpop.f32.mrb[0].mxu0
        %1860 = vdwg.mxu0
        %1861 = vmatprep.subr.bf16.mxu0 %v1788
        %1862 = vmatpush1.bf16.msra.mxu0 %v1787
        %1863 = vmatprep.subr.bf16.mxu0 %v1792
        %1864 = vmatpush1.bf16.msra.mxu0 %v1791
        %1865 = vmatprep.subr.bf16.mxu0 %v1796
        %1866 = vmatpush1.bf16.msra.mxu0 %v1795
        %1867 = vmatprep.subr.bf16.mxu0 %v1800
        %1868 = vmatpush1.bf16.msra.mxu0 %v1799
        %1869 = vmatprep.subr.bf16.mxu0 0
        %1870 = vmatpush1.bf16.msra.mxu0 0
        %1871 = vmatprep.subr.bf16.mxu0 0
        %1872 = vmatpush1.bf16.msra.mxu0 0
        %1873 = vmatprep.subr.bf16.mxu0 0
        %1874 = vmatpush1.bf16.msra.mxu0 0
        %1875 = vmatprep.subr.bf16.mxu0 0
        %1876 = vmatpush1.bf16.msra.mxu0 0
        %1877 = vmatprep.subr.bf16.mxu0 0
        %1878 = vmatpush1.bf16.msra.mxu0 0
        %1879 = vmatprep.subr.bf16.mxu0 0
        %1880 = vmatpush1.bf16.msra.mxu0 0
        %1881 = vmatprep.subr.bf16.mxu0 0
        %1882 = vmatpush1.bf16.msra.mxu0 0
        %1883 = vmatprep.subr.bf16.mxu0 0
        %1884 = vmatpush1.bf16.msra.mxu0 0
        %1885 = vmatprep.subr.bf16.mxu0 0
        %1886 = vmatpush1.bf16.msra.mxu0 0
        %1887 = vmatprep.subr.bf16.mxu0 0
        %1888 = vmatpush1.bf16.msra.mxu0 0
        %1889 = vmatprep.subr.bf16.mxu0 0
        %1890 = vmatpush1.bf16.msra.mxu0 0
        %1891 = vmatprep.subr.bf16.mxu0 0
        %1892 = vmatpush1.bf16.msra.mxu0 0
        %1893 = vmatprep.mubr.bf16.mxu0 0
        %1894 = vmatmul.mubr.bf16.gmra.mrb[0].mxu0 %v1818
        %v1895 = vpop.f32.mrb[0].mxu0
        %v1896 = vadd.f32 %v1728, %v1895
        %v1897 = vpop.f32.mrb[0].mxu0
        %v1898 = vadd.f32 %v1732, %v1897
        %v1899 = vpop.f32.mrb[0].mxu0
        %v1900 = vpop.f32.mrb[0].mxu0
        %1901 = vdwg.mxu0
        %v1902 = vxor.u32 %v1896, 2147483648
        %v1903 = vxor.u32 %v1898, 2147483648
        %v1904 = vmul.f32 %v1902, 1.442695
        %v1905 = vpow.pop %v1904
        %v1906 = vmul.f32 %v1903, 1.442695
        %v1907 = vpow.pop %v1906
        %v1908 = vadd.f32 %v1905, 1.0
        %v1909 = vadd.f32 %v1907, 1.0
        %v1910 = vrcp.pop %v1908
        %v1911 = vmul.f32 1.0, %v1910
        %v1912 = vrcp.pop %v1909
        %v1913 = vmul.f32 1.0, %v1912
        %v1914 = vmul.f32 %v1896, %v1911
        %v1915 = vmul.f32 %v1898, %v1913
        %v1916 = vmul.f32 %v1855, %v1914
        %v1917 = vmul.f32 %v1857, %v1915
        %v1918 = vpack.c.bf16 %v1916, %v1916
        %v1919 = vpack.c.bf16 %v1917, %v1917
        %s1920 = scalar_lea.vmem %s10, 128
        %v1921 = vld [vmem:[%s1920] sm:$0xf]
        %v1922 = vld [vmem:[%s1920 + $0x4] sm:$0xf]
        %v1923 = vld [vmem:[%s1920 + $0x8] sm:$0xf]
        %v1924 = vld [vmem:[%s1920 + $0xc] sm:$0xf]
        %v1925 = vld [vmem:[%s1920 + $0x10] sm:$0xf]
        %v1926 = vld [vmem:[%s1920 + $0x14] sm:$0xf]
        %v1927 = vld [vmem:[%s1920 + $0x18] sm:$0xf]
        %v1928 = vld [vmem:[%s1920 + $0x1c] sm:$0xf]
        %v1929 = vld [vmem:[%s1920 + $0x20] sm:$0xf]
        %v1930 = vld [vmem:[%s1920 + $0x24] sm:$0xf]
        %v1931 = vld [vmem:[%s1920 + $0x28] sm:$0xf]
        %v1932 = vld [vmem:[%s1920 + $0x2c] sm:$0xf]
        %v1933 = vld [vmem:[%s1920 + $0x30] sm:$0xf]
        %v1934 = vld [vmem:[%s1920 + $0x34] sm:$0xf]
        %v1935 = vld [vmem:[%s1920 + $0x38] sm:$0xf]
        %v1936 = vld [vmem:[%s1920 + $0x3c] sm:$0xf]
        %v1937 = vld [vmem:[%s1920 + $0x40] sm:$0xf]
        %v1938 = vld [vmem:[%s1920 + $0x44] sm:$0xf]
        %v1939 = vld [vmem:[%s1920 + $0x48] sm:$0xf]
        %v1940 = vld [vmem:[%s1920 + $0x4c] sm:$0xf]
        %v1941 = vld [vmem:[%s1920 + $0x50] sm:$0xf]
        %v1942 = vld [vmem:[%s1920 + $0x54] sm:$0xf]
        %v1943 = vld [vmem:[%s1920 + $0x58] sm:$0xf]
        %v1944 = vld [vmem:[%s1920 + $0x5c] sm:$0xf]
        %v1945 = vld [vmem:[%s1920 + $0x60] sm:$0xf]
        %v1946 = vld [vmem:[%s1920 + $0x64] sm:$0xf]
        %v1947 = vld [vmem:[%s1920 + $0x68] sm:$0xf]
        %v1948 = vld [vmem:[%s1920 + $0x6c] sm:$0xf]
        %v1949 = vld [vmem:[%s1920 + $0x70] sm:$0xf]
        %v1950 = vld [vmem:[%s1920 + $0x74] sm:$0xf]
        %v1951 = vld [vmem:[%s1920 + $0x78] sm:$0xf]
        %v1952 = vld [vmem:[%s1920 + $0x7c] sm:$0xf]
        %v1985 = vunpack.c.l.b16 %v1921
        %v1986 = vunpack.c.l.b16 %v1922
        %v1987 = vunpack.c.l.b16 %v1923
        %v1988 = vunpack.c.l.b16 %v1924
        %v1989 = vunpack.c.l.b16 %v1925
        %v1990 = vunpack.c.l.b16 %v1926
        %v1991 = vunpack.c.l.b16 %v1927
        %v1992 = vunpack.c.l.b16 %v1928
        %v1993 = vunpack.c.l.b16 %v1929
        %v1994 = vunpack.c.l.b16 %v1930
        %v1995 = vunpack.c.l.b16 %v1931
        %v1996 = vunpack.c.l.b16 %v1932
        %v1997 = vunpack.c.l.b16 %v1933
        %v1998 = vunpack.c.l.b16 %v1934
        %v1999 = vunpack.c.l.b16 %v1935
        %v2000 = vunpack.c.l.b16 %v1936
        %v2001 = vunpack.c.l.b16 %v1937
        %v2002 = vunpack.c.l.b16 %v1938
        %v2003 = vunpack.c.l.b16 %v1939
        %v2004 = vunpack.c.l.b16 %v1940
        %v2005 = vunpack.c.l.b16 %v1941
        %v2006 = vunpack.c.l.b16 %v1942
        %v2007 = vunpack.c.l.b16 %v1943
        %v2008 = vunpack.c.l.b16 %v1944
        %v2009 = vunpack.c.l.b16 %v1945
        %v2010 = vunpack.c.l.b16 %v1946
        %v2011 = vunpack.c.l.b16 %v1947
        %v2012 = vunpack.c.l.b16 %v1948
        %v2013 = vunpack.c.l.b16 %v1949
        %v2014 = vunpack.c.l.b16 %v1950
        %v2015 = vunpack.c.l.b16 %v1951
        %v2016 = vunpack.c.l.b16 %v1952
        %v2017 = vpack.c.b16 %v1986, %v1985
        %v2018 = vpack.c.b16 %v1988, %v1987
        %v2019 = vpack.c.b16 %v1990, %v1989
        %v2020 = vpack.c.b16 %v1992, %v1991
        %v2021 = vpack.c.b16 %v1994, %v1993
        %v2022 = vpack.c.b16 %v1996, %v1995
        %v2023 = vpack.c.b16 %v1998, %v1997
        %v2024 = vpack.c.b16 %v2000, %v1999
        %v2025 = vpack.c.b16 %v2002, %v2001
        %v2026 = vpack.c.b16 %v2004, %v2003
        %v2027 = vpack.c.b16 %v2006, %v2005
        %v2028 = vpack.c.b16 %v2008, %v2007
        %v2029 = vpack.c.b16 %v2010, %v2009
        %v2030 = vpack.c.b16 %v2012, %v2011
        %v2031 = vpack.c.b16 %v2014, %v2013
        %v2032 = vpack.c.b16 %v2016, %v2015
        %2049 = vmatprep.subr.bf16.mxu0 0
        %2050 = vmatpush1.bf16.msra.mxu0 %v2017
        %2051 = vmatprep.subr.bf16.mxu0 0
        %2052 = vmatpush1.bf16.msra.mxu0 %v2018
        %2053 = vmatprep.subr.bf16.mxu0 0
        %2054 = vmatpush1.bf16.msra.mxu0 %v2019
        %2055 = vmatprep.subr.bf16.mxu0 0
        %2056 = vmatpush1.bf16.msra.mxu0 %v2020
        %2057 = vmatprep.subr.bf16.mxu0 0
        %2058 = vmatpush1.bf16.msra.mxu0 %v2021
        %2059 = vmatprep.subr.bf16.mxu0 0
        %2060 = vmatpush1.bf16.msra.mxu0 %v2022
        %2061 = vmatprep.subr.bf16.mxu0 0
        %2062 = vmatpush1.bf16.msra.mxu0 %v2023
        %2063 = vmatprep.subr.bf16.mxu0 0
        %2064 = vmatpush1.bf16.msra.mxu0 %v2024
        %2065 = vmatprep.subr.bf16.mxu0 0
        %2066 = vmatpush1.bf16.msra.mxu0 %v2025
        %2067 = vmatprep.subr.bf16.mxu0 0
        %2068 = vmatpush1.bf16.msra.mxu0 %v2026
        %2069 = vmatprep.subr.bf16.mxu0 0
        %2070 = vmatpush1.bf16.msra.mxu0 %v2027
        %2071 = vmatprep.subr.bf16.mxu0 0
        %2072 = vmatpush1.bf16.msra.mxu0 %v2028
        %2073 = vmatprep.subr.bf16.mxu0 0
        %2074 = vmatpush1.bf16.msra.mxu0 %v2029
        %2075 = vmatprep.subr.bf16.mxu0 0
        %2076 = vmatpush1.bf16.msra.mxu0 %v2030
        %2077 = vmatprep.subr.bf16.mxu0 0
        %2078 = vmatpush1.bf16.msra.mxu0 %v2031
        %2079 = vmatprep.subr.bf16.mxu0 0
        %2080 = vmatpush1.bf16.msra.mxu0 %v2032
        %2081 = vmatprep.mubr.bf16.mxu0 %v1919
        %2082 = vmatmul.mubr.bf16.gmra.mrb[0].mxu0 %v1918
        %v2083 = vpop.f32.mrb[0].mxu0
        %v2084 = vadd.f32 0.0, %v2083
        %v2085 = vpop.f32.mrb[0].mxu0
        %v2086 = vpop.f32.mrb[0].mxu0
        %v2087 = vpop.f32.mrb[0].mxu0
        %2088 = vdwg.mxu0
        %v2089 = vadd.f32 %v1673, %v2084
        %s2090 = scalar_lea.vmem %s11, 1
        %v2091 = vld [vmem:[%s2090] sm:$0x1]
        %v2093 = vlaneseq
        %v2094 = vshrl.u32 %v2093, 7
        %v2095 = vsub.s32 0, %v2094
        %v2096 = vrot.slane %v2091, %v2095
        %v2098 = vadd.f32 %v2089, %v2096
        %v2099 = vpack.c.bf16 %v2098, %v2098
        %v2100 = vld [vmem:[%s4] sm:$0xf]
        %v2101 = vld [vmem:[%s4 + $0x4] sm:$0xf]
        %v2102 = vld [vmem:[%s4 + $0x8] sm:$0xf]
        %v2103 = vld [vmem:[%s4 + $0xc] sm:$0xf]
        %v2104 = vld [vmem:[%s4 + $0x10] sm:$0xf]
        %v2105 = vld [vmem:[%s4 + $0x14] sm:$0xf]
        %v2106 = vld [vmem:[%s4 + $0x18] sm:$0xf]
        %v2107 = vld [vmem:[%s4 + $0x1c] sm:$0xf]
        %v2116 = vunpack.c.l.b16 %v2100
        %v2117 = vunpack.c.l.b16 %v2101
        %v2118 = vunpack.c.l.b16 %v2102
        %v2119 = vunpack.c.l.b16 %v2103
        %v2120 = vunpack.c.l.b16 %v2104
        %v2121 = vunpack.c.l.b16 %v2105
        %v2122 = vunpack.c.l.b16 %v2106
        %v2123 = vunpack.c.l.b16 %v2107
        %v2124 = vpack.c.b16 %v2117, %v2116
        %v2125 = vpack.c.b16 %v2119, %v2118
        %v2126 = vpack.c.b16 %v2121, %v2120
        %v2127 = vpack.c.b16 %v2123, %v2122
        %v2133 = vsel %vm475, %v2099, 0
        %2135 = vmatprep.subr.bf16.mxu0 0
        %2136 = vmatpush1.bf16.msra.mxu0 %v2124
        %2137 = vmatprep.subr.bf16.mxu0 0
        %2138 = vmatpush1.bf16.msra.mxu0 %v2125
        %2139 = vmatprep.subr.bf16.mxu0 0
        %2140 = vmatpush1.bf16.msra.mxu0 %v2126
        %2141 = vmatprep.subr.bf16.mxu0 0
        %2142 = vmatpush1.bf16.msra.mxu0 %v2127
        %2143 = vmatprep.subr.bf16.mxu0 0
        %2144 = vmatpush1.bf16.msra.mxu0 0
        %2145 = vmatprep.subr.bf16.mxu0 0
        %2146 = vmatpush1.bf16.msra.mxu0 0
        %2147 = vmatprep.subr.bf16.mxu0 0
        %2148 = vmatpush1.bf16.msra.mxu0 0
        %2149 = vmatprep.subr.bf16.mxu0 0
        %2150 = vmatpush1.bf16.msra.mxu0 0
        %2151 = vmatprep.subr.bf16.mxu0 0
        %2152 = vmatpush1.bf16.msra.mxu0 0
        %2153 = vmatprep.subr.bf16.mxu0 0
        %2154 = vmatpush1.bf16.msra.mxu0 0
        %2155 = vmatprep.subr.bf16.mxu0 0
        %2156 = vmatpush1.bf16.msra.mxu0 0
        %2157 = vmatprep.subr.bf16.mxu0 0
        %2158 = vmatpush1.bf16.msra.mxu0 0
        %2159 = vmatprep.subr.bf16.mxu0 0
        %2160 = vmatpush1.bf16.msra.mxu0 0
        %2161 = vmatprep.subr.bf16.mxu0 0
        %2162 = vmatpush1.bf16.msra.mxu0 0
        %2163 = vmatprep.subr.bf16.mxu0 0
        %2164 = vmatpush1.bf16.msra.mxu0 0
        %2165 = vmatprep.subr.bf16.mxu0 0
        %2166 = vmatpush1.bf16.msra.mxu0 0
        %2167 = vmatprep.mubr.bf16.mxu0 0
        %2168 = vmatmul.mubr.bf16.gmra.mrb[0].mxu0 %v2133
        %v2169 = vpop.f32.mrb[0].mxu0
        %v2170 = vadd.f32 0.0, %v2169
        %v2171 = vpop.f32.mrb[0].mxu0
        %v2172 = vpop.f32.mrb[0].mxu0
        %v2173 = vpop.f32.mrb[0].mxu0
        %2174 = vdwg.mxu0
        %2175 = vst [vmem:[%s404] sm:$0xff] %v2170
        %s2176 = sand.u32 %s291, 1
        %s2177 = scalar_lea.sflag [#allocation3], %s2176
        %s2178 = sand.u32 %s291, 1
        %s2179 = smul.addr %s2178, 8
        %s2180 = scalar_lea.vmem [#allocation2], %s2179
        // Predicated region
        $region69: #{continuous_transformer_forward.1} parent=67 // pred_check
          %p2181 = pneg %p301
        $region70: #{continuous_transformer_forward.1} parent=67 // pred_check_branch
          %2183 = sbr.rel (%p2181) target = $region72
        $region71: #{continuous_transformer_forward.1} parent=67 // pred_region
          %s2185 = ssub.s32 128, 128
          %2186 = vsyncadd %s2177, %s2185
          %s2187 = smul.addr %s26, 128
          %s2188 = scalar_lea.hbm %s12, %s2187
          %s2190 = sshll.u32 %s2180, 4
          %s2191 = int_to_ptr.vmem [resolvable:$true] %s2190
          %2193 = dma.vmem_to_hbm [thread:$0]  %s2191, 128, %s2188, %s2177
        $region72: #{continuous_transformer_forward.1} parent=67 // pred_fallthru
          _
      $region68: #{continuous_transformer_forward.1} parent=5 // pred_fallthru
        _
      %p2194 = scmp.le.s32.totalorder 2, %s21
      // Predicated region
      $region73: #{continuous_transformer_forward.1} parent=5 // pred_check
        %p2195 = pneg %p2194
      $region74: #{continuous_transformer_forward.1} parent=5 // pred_check_branch
        %2197 = sbr.rel (%p2195) target = $region76
      $region75: #{continuous_transformer_forward.1} parent=5 // pred_region
        %s2198 = ssub.s32 %s21, 2
        // Predicated region
        $region77: #{continuous_transformer_forward.1} parent=75 // pred_check
          %p2199 = pneg %p307
        $region78: #{continuous_transformer_forward.1} parent=75 // pred_check_branch
          %2201 = sbr.rel (%p2199) target = $region80
        $region79: #{continuous_transformer_forward.1} parent=75 // pred_region
          %s2202 = sand.u32 %s292, 1
          %s2203 = scalar_lea.sflag [#allocation3], %s2202
          %s2204 = sand.u32 %s292, 1
          %s2205 = smul.addr %s2204, 8
          %s2206 = scalar_lea.vmem [#allocation2], %s2205
          %2207 = dma.done %s2203, 128
        $region80: #{continuous_transformer_forward.1} parent=75 // pred_fallthru
          _
      $region76: #{continuous_transformer_forward.1} parent=5 // pred_fallthru
        _
    $region6: #{continuous_transformer_forward.1} parent=1 // loop_footer
      %s25 = sadd.s32 1, %s21
    $region7: #{continuous_transformer_forward.1} parent=1 // loop_footer_branch
      %20 = sbr.rel target = $region3
    $region8: #{continuous_transformer_forward.1} parent=1 // loop_exit
      _
    %2208 = vsyncpa [#allocation3], 1
    %s2209 = scalar_lea.sflag [#allocation3], 1
    %2210 = vsyncpa %s2209, 1

</llo_original>
